<compile_context>
chip_gen: v7x
topology: tpu7x:2x2x1
jax: 0.10.0
libtpu: 0.0.40
codegen_flags: <defaults>
</compile_context>

<pallas_src>
import functools

import jax
import jax.numpy as jnp
from jax.experimental import pallas as pl
from jax.experimental.pallas import tpu as pltpu


def _round_up(x, m):
    return (x + m - 1) // m * m


def _cdiv(a, b):
    return (a + b - 1) // b


def _device_kind():
    try:
        return jax.devices()[0].device_kind.lower()
    except Exception:
        return ""


def _vmem_capacity_bytes():
    try:
        cap = getattr(pltpu.get_tpu_info(), "vmem_capacity_bytes", None)
        if cap:
            return int(cap)
    except Exception:
        pass
    return 64 << 20  # conservative: v7x per-TensorCore VMEM


def _community_ae_kernel(
    dropout_p, keep_threshold, sigmoid_in_bf16,
    seed_ref,                                    # scalar-prefetch (SMEM), (1,)
    b_ref,                                       # (tile_rows, num_nodes), caller dtype
    w1_ref, b1_ref, w2_ref, b2_ref, w3_ref, b3_ref,
    w4_ref, b4_ref, w5_ref, b5_ref,              # resident enc1..enc3/dec1/dec2
    w6_ref, b6_ref,                              # dec3 column tile (n_enc_1, tile_cols)
    hid_ref,                                     # (tile_rows, slab_w) f32 = [h1|h2|za], 128-aligned segs
    rec_ref,                                     # (tile_rows, tile_cols) rec dtype
    d2_ref,                                      # VMEM scratch (tile_rows, n_enc_1) bf16, persists over cols
):
    """CommunityAE forward for one (row tile, dec3 column tile) grid cell."""
    j = pl.program_id(1)
    if dropout_p > 0.0:
        pltpu.prng_seed(seed_ref[0]
                        + pl.program_id(0) * pl.num_programs(1) + j)

    def linear(v_bf16, w_ref_, bias_ref_):
        # bf16 operands -> MXU native; f32 accumulate; f32 bias add.
        return (jnp.dot(v_bf16, w_ref_[...], preferred_element_type=jnp.float32)
                + bias_ref_[...])

    def dropout(v):
        # PyTorch F.dropout defaults to training=True, so p>0 drops even here.
        # TODO(synk): uses the TPU hardware PRNG, not PyTorch's RNG stream
        # (only p=0 is bit-comparable with the PyTorch module).
        if dropout_p <= 0.0:
            return v
        bits = pltpu.bitcast(pltpu.prng_random_bits(v.shape), jnp.uint32)
        keep = bits >= jnp.uint32(keep_threshold)          # P(keep) = 1 - p
        scale = jnp.asarray(1.0 / (1.0 - dropout_p), v.dtype)
        return jnp.where(keep, v * scale, jnp.zeros_like(v))

    @pl.when(j == 0)
    def _encode_and_pack():
        # Per-tile cast removes the wrapper-side B.astype HBM round trip.
        x = b_ref[...].astype(jnp.bfloat16)
        h1 = dropout(jnp.maximum(linear(x, w1_ref, b1_ref), 0.0))
        h2 = dropout(jnp.maximum(linear(h1.astype(jnp.bfloat16), w2_ref, b2_ref), 0.0))
        za = dropout(jnp.maximum(linear(h2.astype(jnp.bfloat16), w3_ref, b3_ref), 0.0))
        d1 = dropout(jnp.maximum(linear(za.astype(jnp.bfloat16), w4_ref, b4_ref), 0.0))
        d2 = dropout(jnp.maximum(linear(d1.astype(jnp.bfloat16), w5_ref, b5_ref), 0.0))
        d2_ref[...] = d2.astype(jnp.bfloat16)   # reused by every dec3 column tile

        # Pack h1|h2|za into one lane-dense slab; each segment starts on a
        # 128-lane boundary so the stores are lane-aligned.
        rows = h1.shape[0]
        off = 0
        for val in (h1, h2, za):
            n = val.shape[1]
            seg = _round_up(n, 128)
            hid_ref[:, off:off + n] = val
            if seg > n:
                hid_ref[:, off + n:off + seg] = jnp.zeros((rows, seg - n), jnp.float32)
            off += seg

    # dec3 on one column slice (every grid step).
    logits = (jnp.dot(d2_ref[...], w6_ref[...], preferred_element_type=jnp.float32)
              + b6_ref[...])
    if sigmoid_in_bf16:
        rec = jax.nn.sigmoid(logits.astype(jnp.bfloat16))   # bf16 EUP on v6e/v7x
    else:
        rec = jax.nn.sigmoid(logits)
    rec_ref[...] = dropout(rec).astype(rec_ref.dtype)


def community_ae_forward(B, params, *, dropout_p=0.0, seed=0,
                         tile_rows=None, tile_cols=None,
                         rec_dtype=jnp.bfloat16):
    """CommunityAE forward with a fused Pallas TPU kernel.

    Returns (hidden1, hidden2, z_a, community_reconstructions).
    hidden* / z_a are f32; the reconstruction dtype is `rec_dtype` (bf16 by
    default to halve the dominant HBM writeback; pass jnp.float32 for full
    precision).
    """
    assert 0.0 <= float(dropout_p) < 1.0, "dropout_p must be in [0, 1)"
    num_nodes = B.shape[0]
    assert B.shape == (num_nodes, num_nodes)

    n1 = params["w1"].shape[1]
    n2 = params["w2"].shape[1]
    n3 = params["w3"].shape[1]
    o2 = _round_up(n1, 128)
    o3 = o2 + _round_up(n2, 128)
    slab_w = o3 + _round_up(n3, 128)

    weights = [params[f"w{i}"].astype(jnp.bfloat16) for i in range(1, 7)]
    biases = [params[f"b{i}"].astype(jnp.float32) for i in range(1, 7)]

    kind = _device_kind()
    is_v5 = "v5" in kind
    is_v7 = ("v7" in kind) or ("tpu7" in kind)
    vmem_cap = _vmem_capacity_bytes()
    rec_dtype = jnp.dtype(rec_dtype)
    sigmoid_in_bf16 = (rec_dtype == jnp.dtype(jnp.bfloat16)) and not is_v5

    # ---- dec3 column tiling (bounds rec tile + w6 slice in VMEM) ----
    ncols_128 = _round_up(num_nodes, 128)
    if tile_cols is None:
        n_col_tiles = max(1, _cdiv(ncols_128, 2048))
        tile_cols = _round_up(_cdiv(ncols_128, n_col_tiles), 128)
    assert tile_cols % 128 == 0
    n_col_tiles = _cdiv(ncols_128, tile_cols)
    cols_padded = n_col_tiles * tile_cols

    b_item = jnp.dtype(B.dtype).itemsize
    rec_item = rec_dtype.itemsize
    res_bytes = (sum(int(w.size) for w in weights[:5]) * 2
                 + sum(int(b.size) for b in biases) * 4)

    def footprint(tr):
        # Worst-case (everything double-buffered) VMEM working set.
        return (2 * tr * num_nodes * b_item                    # B row tile
                + 2 * tr * tile_cols * rec_item                # rec column tile
                + 2 * tr * slab_w * 4                          # hidden slab tile
                + 2 * (n1 * tile_cols * 2 + tile_cols * 4)     # w6 / b6 column tiles
                + tr * n1 * 2                                  # d2 scratch (bf16)
                + 2 * res_bytes)                               # resident weights

    if tile_rows is None:
        tile_rows = 128 if is_v5 else 256          # full MXU M per generation
        min_row_steps = 4 if is_v7 else 2          # >= 2 row steps per TensorCore
        while tile_rows > 8 and _cdiv(num_nodes, tile_rows) < min_row_steps:
            tile_rows //= 2
        while tile_rows > 64 and footprint(tile_rows) > (vmem_cap * 5) // 8:
            tile_rows //= 2
        # TODO(synk): for graphs so large that even tile_rows=64 overflows VMEM
        # (~30k+ nodes on v7x), additionally K-tile the enc1 matmul so the
        # full-width B row tile is not VMEM resident.
    assert tile_rows % 8 == 0 and tile_rows > 0

    rows_padded = _round_up(num_nodes, tile_rows)
    x = B
    if rows_padded != num_nodes:
        x = jnp.pad(x, ((0, rows_padded - num_nodes), (0, 0)))
    # NOTE: B is NOT cast here; the kernel casts per tile.  For repeated calls
    # (training loop) pass a pre-cast bf16 B to also halve the HBM read.

    w6, b6 = weights[5], biases[5]
    if cols_padded != num_nodes:
        w6 = jnp.pad(w6, ((0, 0), (0, cols_padded - num_nodes)))
        b6 = jnp.pad(b6, ((0, 0), (0, cols_padded - num_nodes)))

    grid = (rows_padded // tile_rows, n_col_tiles)
    vmem_limit = int(min(max(vmem_cap - (4 << 20), 32 << 20),
                         max(2 * footprint(tile_rows) + (8 << 20), 48 << 20)))

    out_shape = (
        jax.ShapeDtypeStruct((rows_padded, slab_w), jnp.float32),
        jax.ShapeDtypeStruct((rows_padded, cols_padded), rec_dtype),
    )
    seed_arr = jnp.asarray([seed], dtype=jnp.int32)
    keep_threshold = min(int(round(float(dropout_p) * 2.0 ** 32)), 2 ** 32 - 1)
    kernel = functools.partial(_community_ae_kernel, float(dropout_p),
                               keep_threshold, bool(sigmoid_in_bf16))

    def run(single_buffer_weights):
        res_kwargs = ({"pipeline_mode": pl.Buffered(buffer_count=1)}
                      if single_buffer_weights else {})

        def resident(arr):
            nd = arr.ndim
            return pl.BlockSpec(arr.shape, lambda i, j, _s, _nd=nd: (0,) * _nd,
                                **res_kwargs)

        in_specs = [pl.BlockSpec((tile_rows, num_nodes), lambda i, j, _s: (i, 0))]
        for w, b in zip(weights[:5], biases[:5]):
            in_specs += [resident(w), resident(b)]
        in_specs += [pl.BlockSpec((n1, tile_cols), lambda i, j, _s: (0, j)),
                     pl.BlockSpec((1, tile_cols), lambda i, j, _s: (0, j))]

        out_specs = [pl.BlockSpec((tile_rows, slab_w), lambda i, j, _s: (i, 0)),
                     pl.BlockSpec((tile_rows, tile_cols), lambda i, j, _s: (i, j))]

        return pl.pallas_call(
            kernel,
            out_shape=out_shape,
            grid_spec=pltpu.PrefetchScalarGridSpec(
                num_scalar_prefetch=1,
                grid=grid,
                in_specs=in_specs,
                out_specs=out_specs,
                scratch_shapes=[pltpu.VMEM((tile_rows, n1), jnp.bfloat16)]),
            compiler_params=pltpu.CompilerParams(
                dimension_semantics=("parallel", "arbitrary"),
                vmem_limit_bytes=vmem_limit),
        )(seed_arr, x,
          weights[0], biases[0], weights[1], biases[1], weights[2], biases[2],
          weights[3], biases[3], weights[4], biases[4],
          w6, b6)

    try:
        slab, rec = run(single_buffer_weights=True)
    except Exception as e:
        # Only fall back when the failure is about the Buffered(1) single-buffer
        # request itself; genuine OOM / lowering errors are re-raised.
        msg = f"{type(e).__name__}: {e}"
        if not any(k in msg for k in ("Buffered", "buffer_count",
                                      "pipeline_mode", "buffer")):
            raise
        slab, rec = run(single_buffer_weights=False)

    hidden1 = slab[:num_nodes, 0:n1]
    hidden2 = slab[:num_nodes, o2:o2 + n2]
    z_a = slab[:num_nodes, o3:o3 + n3]
    rec = rec[:num_nodes, :num_nodes]
    return hidden1, hidden2, z_a, rec


def _xavier_uniform(key, fan_in, fan_out):
    # Matches nn.init.xavier_uniform_ on a (out, in) weight; built directly in
    # the transposed (in, out) layout used by the kernel.
    limit = jnp.sqrt(6.0 / (fan_in + fan_out))
    return jax.random.uniform(key, (fan_in, fan_out), dtype=jnp.float32,
                              minval=-limit, maxval=limit)


def init_community_ae_params(key, num_nodes, n_enc_1, n_enc_2, n_enc_3):
    dims = [
        (num_nodes, n_enc_1),  # enc1
        (n_enc_1, n_enc_2),    # enc2
        (n_enc_2, n_enc_3),    # enc3
        (n_enc_3, n_enc_2),    # dec1
        (n_enc_2, n_enc_1),    # dec2
        (n_enc_1, num_nodes),  # dec3
    ]
    params = {}
    keys = jax.random.split(key, len(dims))
    for idx, ((fin, fout), k) in enumerate(zip(dims, keys), start=1):
        params[f"w{idx}"] = _xavier_uniform(k, fin, fout)
        params[f"b{idx}"] = jnp.zeros((1, fout), dtype=jnp.float32)
    return params


def _reference_forward(B, params):
    """Pure-JAX f32 reference matching the PyTorch module (dropout p=0)."""
    def lin(v, i):
        return v @ params[f"w{i}"] + params[f"b{i}"]
    h1 = jnp.maximum(lin(B, 1), 0.0)
    h2 = jnp.maximum(lin(h1, 2), 0.0)
    za = jnp.maximum(lin(h2, 3), 0.0)
    d1 = jnp.maximum(lin(za, 4), 0.0)
    d2 = jnp.maximum(lin(d1, 5), 0.0)
    rec = jax.nn.sigmoid(lin(d2, 6))
    return h1, h2, za, rec


if __name__ == "__main__":
    # Small, deterministic example shapes.
    num_nodes, n_enc_1, n_enc_2, n_enc_3 = 256, 64, 32, 16
    dropout = 0.0  # F.dropout with p=0 is the identity (deterministic forward).

    key = jax.random.PRNGKey(0)
    k_b, k_params = jax.random.split(key)

    # Modularity-like symmetric matrix B.
    B = jax.random.normal(k_b, (num_nodes, num_nodes), dtype=jnp.float32)
    B = 0.5 * (B + B.T)

    params = init_community_ae_params(k_params, num_nodes, n_enc_1, n_enc_2, n_enc_3)

    outs = community_ae_forward(B, params, dropout_p=dropout)
    hidden1, hidden2, z_a, rec = jax.block_until_ready(outs)

    # Shape checks (match the PyTorch module's outputs).
    assert hidden1.shape == (num_nodes, n_enc_1)
    assert hidden2.shape == (num_nodes, n_enc_2)
    assert z_a.shape == (num_nodes, n_enc_3)
    assert rec.shape == (num_nodes, num_nodes)

    # Numerical check against the f32 reference (loose tolerance: bf16 MXU path
    # plus bf16 reconstruction output).
    refs = _reference_forward(B, params)
    for got, want in zip((hidden1, hidden2, z_a, rec), refs):
        got = got.astype(jnp.float32)
        err = float(jnp.max(jnp.abs(got - want)))
        assert bool(jnp.allclose(got, want, atol=1e-1, rtol=1e-1)), err

    print("KERNEL_OK")
</pallas_src>

<mosaic_0001>
module attributes {stable_mosaic.version = 11 : i64} {
  func.func @_community_ae_kernel(%arg0: i32, %arg1: i32, %arg2: memref<1xi32, #tpu.memory_space<smem>>, %arg3: memref<128x256xf32, #tpu.memory_space<vmem>>, %arg4: memref<256x64xbf16, #tpu.memory_space<vmem>>, %arg5: memref<1x64xf32, #tpu.memory_space<vmem>>, %arg6: memref<64x32xbf16, #tpu.memory_space<vmem>>, %arg7: memref<1x32xf32, #tpu.memory_space<vmem>>, %arg8: memref<32x16xbf16, #tpu.memory_space<vmem>>, %arg9: memref<1x16xf32, #tpu.memory_space<vmem>>, %arg10: memref<16x32xbf16, #tpu.memory_space<vmem>>, %arg11: memref<1x32xf32, #tpu.memory_space<vmem>>, %arg12: memref<32x64xbf16, #tpu.memory_space<vmem>>, %arg13: memref<1x64xf32, #tpu.memory_space<vmem>>, %arg14: memref<64x256xbf16, #tpu.memory_space<vmem>>, %arg15: memref<1x256xf32, #tpu.memory_space<vmem>>, %arg16: memref<128x384xf32, #tpu.memory_space<vmem>>, %arg17: memref<128x256xbf16, #tpu.memory_space<vmem>>, %arg18: memref<128x64xbf16, #tpu.memory_space<vmem>>) attributes {dimension_semantics = [#tpu.dimension_semantics<parallel>, #tpu.dimension_semantics<arbitrary>], iteration_bounds = array<i64: 2, 1>, scalar_prefetch = 1 : i64, scratch_operands = 1 : i64, tpu.core_type = #tpu.core_type<tc>, window_params = [{transform_indices = @transform_0, window_bounds = array<i64: 128, 256>}, {pipeline_mode = #tpu.pipeline_mode<synchronous>, transform_indices = @transform_1, window_bounds = array<i64: 256, 64>}, {pipeline_mode = #tpu.pipeline_mode<synchronous>, transform_indices = @transform_2, window_bounds = array<i64: 1, 64>}, {pipeline_mode = #tpu.pipeline_mode<synchronous>, transform_indices = @transform_3, window_bounds = array<i64: 64, 32>}, {pipeline_mode = #tpu.pipeline_mode<synchronous>, transform_indices = @transform_4, window_bounds = array<i64: 1, 32>}, {pipeline_mode = #tpu.pipeline_mode<synchronous>, transform_indices = @transform_5, window_bounds = array<i64: 32, 16>}, {pipeline_mode = #tpu.pipeline_mode<synchronous>, transform_indices = @transform_6, window_bounds = array<i64: 1, 16>}, {pipeline_mode = #tpu.pipeline_mode<synchronous>, transform_indices = @transform_7, window_bounds = array<i64: 16, 32>}, {pipeline_mode = #tpu.pipeline_mode<synchronous>, transform_indices = @transform_8, window_bounds = array<i64: 1, 32>}, {pipeline_mode = #tpu.pipeline_mode<synchronous>, transform_indices = @transform_9, window_bounds = array<i64: 32, 64>}, {pipeline_mode = #tpu.pipeline_mode<synchronous>, transform_indices = @transform_10, window_bounds = array<i64: 1, 64>}, {transform_indices = @transform_11, window_bounds = array<i64: 64, 256>}, {transform_indices = @transform_12, window_bounds = array<i64: 1, 256>}, {transform_indices = @transform_13, window_bounds = array<i64: 128, 384>}, {transform_indices = @transform_14, window_bounds = array<i64: 128, 256>}]} {
    %c0_i32 = arith.constant 0 : i32
    %0 = arith.cmpi eq, %arg1, %c0_i32 : i32
    %1 = arith.extui %0 : i1 to i32
    %c0_i32_0 = arith.constant 0 : i32
    %2 = arith.cmpi ne, %1, %c0_i32_0 : i32
    scf.if %2 {
      %c0_9 = arith.constant 0 : index
      %c0_10 = arith.constant 0 : index
      %16 = vector.load %arg3[%c0_9, %c0_10] : memref<128x256xf32, #tpu.memory_space<vmem>>, vector<128x256xf32>
      %17 = arith.truncf %16 : vector<128x256xf32> to vector<128x256xbf16>
      %c0_11 = arith.constant 0 : index
      %c0_12 = arith.constant 0 : index
      %18 = vector.load %arg4[%c0_11, %c0_12] : memref<256x64xbf16, #tpu.memory_space<vmem>>, vector<256x64xbf16>
      %cst_13 = arith.constant dense<0.000000e+00> : vector<128x64xf32>
      %19 = tpu.matmul %17, %18, %cst_13 {dimension_numbers = #tpu.dot_dimension_numbers<[1], [0], [0], [1], [0, 0, 1, 1], [], []>} : vector<128x256xbf16>, vector<256x64xbf16>, vector<128x64xf32> -> vector<128x64xf32>
      %c0_14 = arith.constant 0 : index
      %c0_15 = arith.constant 0 : index
      %20 = vector.load %arg5[%c0_14, %c0_15] : memref<1x64xf32, #tpu.memory_space<vmem>>, vector<1x64xf32>
      %21 = vector.broadcast %20 : vector<1x64xf32> to vector<128x64xf32>
      %22 = arith.addf %19, %21 : vector<128x64xf32>
      %cst_16 = arith.constant 0.000000e+00 : f32
      %23 = vector.broadcast %cst_16 : f32 to vector<128x64xf32>
      %24 = arith.maximumf %22, %23 : vector<128x64xf32>
      %25 = arith.truncf %24 : vector<128x64xf32> to vector<128x64xbf16>
      %c0_17 = arith.constant 0 : index
      %c0_18 = arith.constant 0 : index
      %26 = vector.load %arg6[%c0_17, %c0_18] : memref<64x32xbf16, #tpu.memory_space<vmem>>, vector<64x32xbf16>
      %cst_19 = arith.constant dense<0.000000e+00> : vector<128x32xf32>
      %27 = tpu.matmul %25, %26, %cst_19 {dimension_numbers = #tpu.dot_dimension_numbers<[1], [0], [0], [1], [0, 0, 1, 1], [], []>} : vector<128x64xbf16>, vector<64x32xbf16>, vector<128x32xf32> -> vector<128x32xf32>
      %c0_20 = arith.constant 0 : index
      %c0_21 = arith.constant 0 : index
      %28 = vector.load %arg7[%c0_20, %c0_21] : memref<1x32xf32, #tpu.memory_space<vmem>>, vector<1x32xf32>
      %29 = vector.broadcast %28 : vector<1x32xf32> to vector<128x32xf32>
      %30 = arith.addf %27, %29 : vector<128x32xf32>
      %cst_22 = arith.constant 0.000000e+00 : f32
      %31 = vector.broadcast %cst_22 : f32 to vector<128x32xf32>
      %32 = arith.maximumf %30, %31 : vector<128x32xf32>
      %33 = arith.truncf %32 : vector<128x32xf32> to vector<128x32xbf16>
      %c0_23 = arith.constant 0 : index
      %c0_24 = arith.constant 0 : index
      %34 = vector.load %arg8[%c0_23, %c0_24] : memref<32x16xbf16, #tpu.memory_space<vmem>>, vector<32x16xbf16>
      %cst_25 = arith.constant dense<0.000000e+00> : vector<128x16xf32>
      %35 = tpu.matmul %33, %34, %cst_25 {dimension_numbers = #tpu.dot_dimension_numbers<[1], [0], [0], [1], [0, 0, 1, 1], [], []>} : vector<128x32xbf16>, vector<32x16xbf16>, vector<128x16xf32> -> vector<128x16xf32>
      %c0_26 = arith.constant 0 : index
      %c0_27 = arith.constant 0 : index
      %36 = vector.load %arg9[%c0_26, %c0_27] : memref<1x16xf32, #tpu.memory_space<vmem>>, vector<1x16xf32>
      %37 = vector.broadcast %36 : vector<1x16xf32> to vector<128x16xf32>
      %38 = arith.addf %35, %37 : vector<128x16xf32>
      %cst_28 = arith.constant 0.000000e+00 : f32
      %39 = vector.broadcast %cst_28 : f32 to vector<128x16xf32>
      %40 = arith.maximumf %38, %39 : vector<128x16xf32>
      %41 = arith.truncf %40 : vector<128x16xf32> to vector<128x16xbf16>
      %c0_29 = arith.constant 0 : index
      %c0_30 = arith.constant 0 : index
      %42 = vector.load %arg10[%c0_29, %c0_30] : memref<16x32xbf16, #tpu.memory_space<vmem>>, vector<16x32xbf16>
      %cst_31 = arith.constant dense<0.000000e+00> : vector<128x32xf32>
      %43 = tpu.matmul %41, %42, %cst_31 {dimension_numbers = #tpu.dot_dimension_numbers<[1], [0], [0], [1], [0, 0, 1, 1], [], []>} : vector<128x16xbf16>, vector<16x32xbf16>, vector<128x32xf32> -> vector<128x32xf32>
      %c0_32 = arith.constant 0 : index
      %c0_33 = arith.constant 0 : index
      %44 = vector.load %arg11[%c0_32, %c0_33] : memref<1x32xf32, #tpu.memory_space<vmem>>, vector<1x32xf32>
      %45 = vector.broadcast %44 : vector<1x32xf32> to vector<128x32xf32>
      %46 = arith.addf %43, %45 : vector<128x32xf32>
      %cst_34 = arith.constant 0.000000e+00 : f32
      %47 = vector.broadcast %cst_34 : f32 to vector<128x32xf32>
      %48 = arith.maximumf %46, %47 : vector<128x32xf32>
      %49 = arith.truncf %48 : vector<128x32xf32> to vector<128x32xbf16>
      %c0_35 = arith.constant 0 : index
      %c0_36 = arith.constant 0 : index
      %50 = vector.load %arg12[%c0_35, %c0_36] : memref<32x64xbf16, #tpu.memory_space<vmem>>, vector<32x64xbf16>
      %cst_37 = arith.constant dense<0.000000e+00> : vector<128x64xf32>
      %51 = tpu.matmul %49, %50, %cst_37 {dimension_numbers = #tpu.dot_dimension_numbers<[1], [0], [0], [1], [0, 0, 1, 1], [], []>} : vector<128x32xbf16>, vector<32x64xbf16>, vector<128x64xf32> -> vector<128x64xf32>
      %c0_38 = arith.constant 0 : index
      %c0_39 = arith.constant 0 : index
      %52 = vector.load %arg13[%c0_38, %c0_39] : memref<1x64xf32, #tpu.memory_space<vmem>>, vector<1x64xf32>
      %53 = vector.broadcast %52 : vector<1x64xf32> to vector<128x64xf32>
      %54 = arith.addf %51, %53 : vector<128x64xf32>
      %cst_40 = arith.constant 0.000000e+00 : f32
      %55 = vector.broadcast %cst_40 : f32 to vector<128x64xf32>
      %56 = arith.maximumf %54, %55 : vector<128x64xf32>
      %57 = arith.truncf %56 : vector<128x64xf32> to vector<128x64xbf16>
      %c0_41 = arith.constant 0 : index
      %c0_42 = arith.constant 0 : index
      %58 = vector.load %arg18[%c0_41, %c0_42] : memref<128x64xbf16, #tpu.memory_space<vmem>>, vector<128x64xbf16>
      tpu.vector_store %arg18[%c0_41, %c0_42], %57 {strides = array<i32>} : memref<128x64xbf16, #tpu.memory_space<vmem>>, vector<128x64xbf16>,
      %c0_43 = arith.constant 0 : index
      %c0_44 = arith.constant 0 : index
      %59 = vector.load %arg16[%c0_43, %c0_44] : memref<128x384xf32, #tpu.memory_space<vmem>>, vector<128x64xf32>
      tpu.vector_store %arg16[%c0_43, %c0_44], %24 {strides = array<i32>} : memref<128x384xf32, #tpu.memory_space<vmem>>, vector<128x64xf32>,
      %cst_45 = arith.constant 0.000000e+00 : f32
      %60 = vector.broadcast %cst_45 : f32 to vector<128x64xf32>
      %c0_46 = arith.constant 0 : index
      %c64 = arith.constant 64 : index
      %61 = vector.load %arg16[%c0_46, %c64] : memref<128x384xf32, #tpu.memory_space<vmem>>, vector<128x64xf32>
      tpu.vector_store %arg16[%c0_46, %c64], %60 {strides = array<i32>} : memref<128x384xf32, #tpu.memory_space<vmem>>, vector<128x64xf32>,
      %c0_47 = arith.constant 0 : index
      %c128 = arith.constant 128 : index
      %62 = vector.load %arg16[%c0_47, %c128] : memref<128x384xf32, #tpu.memory_space<vmem>>, vector<128x32xf32>
      tpu.vector_store %arg16[%c0_47, %c128], %32 {strides = array<i32>} : memref<128x384xf32, #tpu.memory_space<vmem>>, vector<128x32xf32>,
      %cst_48 = arith.constant 0.000000e+00 : f32
      %63 = vector.broadcast %cst_48 : f32 to vector<128x96xf32>
      %c0_49 = arith.constant 0 : index
      %c160 = arith.constant 160 : index
      %64 = vector.load %arg16[%c0_49, %c160] : memref<128x384xf32, #tpu.memory_space<vmem>>, vector<128x96xf32>
      tpu.vector_store %arg16[%c0_49, %c160], %63 {strides = array<i32>} : memref<128x384xf32, #tpu.memory_space<vmem>>, vector<128x96xf32>,
      %c0_50 = arith.constant 0 : index
      %c256 = arith.constant 256 : index
      %65 = vector.load %arg16[%c0_50, %c256] : memref<128x384xf32, #tpu.memory_space<vmem>>, vector<128x16xf32>
      tpu.vector_store %arg16[%c0_50, %c256], %40 {strides = array<i32>} : memref<128x384xf32, #tpu.memory_space<vmem>>, vector<128x16xf32>,
      %cst_51 = arith.constant 0.000000e+00 : f32
      %66 = vector.broadcast %cst_51 : f32 to vector<128x112xf32>
      %c0_52 = arith.constant 0 : index
      %c272 = arith.constant 272 : index
      %67 = vector.load %arg16[%c0_52, %c272] : memref<128x384xf32, #tpu.memory_space<vmem>>, vector<128x112xf32>
      tpu.vector_store %arg16[%c0_52, %c272], %66 {strides = array<i32>} : memref<128x384xf32, #tpu.memory_space<vmem>>, vector<128x112xf32>,
    } else {
    }
    %c0 = arith.constant 0 : index
    %c0_1 = arith.constant 0 : index
    %3 = vector.load %arg18[%c0, %c0_1] : memref<128x64xbf16, #tpu.memory_space<vmem>>, vector<128x64xbf16>
    %c0_2 = arith.constant 0 : index
    %c0_3 = arith.constant 0 : index
    %4 = vector.load %arg14[%c0_2, %c0_3] : memref<64x256xbf16, #tpu.memory_space<vmem>>, vector<64x256xbf16>
    %cst = arith.constant dense<0.000000e+00> : vector<128x256xf32>
    %5 = tpu.matmul %3, %4, %cst {dimension_numbers = #tpu.dot_dimension_numbers<[1], [0], [0], [1], [0, 0, 1, 1], [], []>} : vector<128x64xbf16>, vector<64x256xbf16>, vector<128x256xf32> -> vector<128x256xf32>
    %c0_4 = arith.constant 0 : index
    %c0_5 = arith.constant 0 : index
    %6 = vector.load %arg15[%c0_4, %c0_5] : memref<1x256xf32, #tpu.memory_space<vmem>>, vector<1x256xf32>
    %7 = vector.broadcast %6 : vector<1x256xf32> to vector<128x256xf32>
    %8 = arith.addf %5, %7 : vector<128x256xf32>
    %9 = arith.truncf %8 : vector<128x256xf32> to vector<128x256xbf16>
    %10 = arith.negf %9 : vector<128x256xbf16>
    %11 = math.exp %10 : vector<128x256xbf16>
    %cst_6 = arith.constant 1.000000e+00 : bf16
    %12 = vector.broadcast %cst_6 : bf16 to vector<128x256xbf16>
    %13 = arith.addf %12, %11 : vector<128x256xbf16>
    %14 = arith.divf %12, %13 : vector<128x256xbf16>
    %c0_7 = arith.constant 0 : index
    %c0_8 = arith.constant 0 : index
    %15 = vector.load %arg17[%c0_7, %c0_8] : memref<128x256xbf16, #tpu.memory_space<vmem>>, vector<128x256xbf16>
    tpu.vector_store %arg17[%c0_7, %c0_8], %14 {strides = array<i32>} : memref<128x256xbf16, #tpu.memory_space<vmem>>, vector<128x256xbf16>,
    return
  }
  func.func @transform_0(%arg0: i32, %arg1: i32, %arg2: memref<1xi32, #tpu.memory_space<smem>>) -> (i32, i32) {
    %c0_i32 = arith.constant 0 : i32
    %c0_i32_0 = arith.constant 0 : i32
    return %arg0, %c0_i32 : i32, i32
  }
  func.func @transform_1(%arg0: i32, %arg1: i32, %arg2: memref<1xi32, #tpu.memory_space<smem>>) -> (i32, i32) {
    %c0_i32 = arith.constant 0 : i32
    %c0_i32_0 = arith.constant 0 : i32
    %c0_i32_1 = arith.constant 0 : i32
    return %c0_i32, %c0_i32_0 : i32, i32
  }
  func.func @transform_2(%arg0: i32, %arg1: i32, %arg2: memref<1xi32, #tpu.memory_space<smem>>) -> (i32, i32) {
    %c0_i32 = arith.constant 0 : i32
    %c0_i32_0 = arith.constant 0 : i32
    %c0_i32_1 = arith.constant 0 : i32
    return %c0_i32, %c0_i32_0 : i32, i32
  }
  func.func @transform_3(%arg0: i32, %arg1: i32, %arg2: memref<1xi32, #tpu.memory_space<smem>>) -> (i32, i32) {
    %c0_i32 = arith.constant 0 : i32
    %c0_i32_0 = arith.constant 0 : i32
    %c0_i32_1 = arith.constant 0 : i32
    return %c0_i32, %c0_i32_0 : i32, i32
  }
  func.func @transform_4(%arg0: i32, %arg1: i32, %arg2: memref<1xi32, #tpu.memory_space<smem>>) -> (i32, i32) {
    %c0_i32 = arith.constant 0 : i32
    %c0_i32_0 = arith.constant 0 : i32
    %c0_i32_1 = arith.constant 0 : i32
    return %c0_i32, %c0_i32_0 : i32, i32
  }
  func.func @transform_5(%arg0: i32, %arg1: i32, %arg2: memref<1xi32, #tpu.memory_space<smem>>) -> (i32, i32) {
    %c0_i32 = arith.constant 0 : i32
    %c0_i32_0 = arith.constant 0 : i32
    %c0_i32_1 = arith.constant 0 : i32
    return %c0_i32, %c0_i32_0 : i32, i32
  }
  func.func @transform_6(%arg0: i32, %arg1: i32, %arg2: memref<1xi32, #tpu.memory_space<smem>>) -> (i32, i32) {
    %c0_i32 = arith.constant 0 : i32
    %c0_i32_0 = arith.constant 0 : i32
    %c0_i32_1 = arith.constant 0 : i32
    return %c0_i32, %c0_i32_0 : i32, i32
  }
  func.func @transform_7(%arg0: i32, %arg1: i32, %arg2: memref<1xi32, #tpu.memory_space<smem>>) -> (i32, i32) {
    %c0_i32 = arith.constant 0 : i32
    %c0_i32_0 = arith.constant 0 : i32
    %c0_i32_1 = arith.constant 0 : i32
    return %c0_i32, %c0_i32_0 : i32, i32
  }
  func.func @transform_8(%arg0: i32, %arg1: i32, %arg2: memref<1xi32, #tpu.memory_space<smem>>) -> (i32, i32) {
    %c0_i32 = arith.constant 0 : i32
    %c0_i32_0 = arith.constant 0 : i32
    %c0_i32_1 = arith.constant 0 : i32
    return %c0_i32, %c0_i32_0 : i32, i32
  }
  func.func @transform_9(%arg0: i32, %arg1: i32, %arg2: memref<1xi32, #tpu.memory_space<smem>>) -> (i32, i32) {
    %c0_i32 = arith.constant 0 : i32
    %c0_i32_0 = arith.constant 0 : i32
    %c0_i32_1 = arith.constant 0 : i32
    return %c0_i32, %c0_i32_0 : i32, i32
  }
  func.func @transform_10(%arg0: i32, %arg1: i32, %arg2: memref<1xi32, #tpu.memory_space<smem>>) -> (i32, i32) {
    %c0_i32 = arith.constant 0 : i32
    %c0_i32_0 = arith.constant 0 : i32
    %c0_i32_1 = arith.constant 0 : i32
    return %c0_i32, %c0_i32_0 : i32, i32
  }
  func.func @transform_11(%arg0: i32, %arg1: i32, %arg2: memref<1xi32, #tpu.memory_space<smem>>) -> (i32, i32) {
    %c0_i32 = arith.constant 0 : i32
    %c0_i32_0 = arith.constant 0 : i32
    return %c0_i32, %arg1 : i32, i32
  }
  func.func @transform_12(%arg0: i32, %arg1: i32, %arg2: memref<1xi32, #tpu.memory_space<smem>>) -> (i32, i32) {
    %c0_i32 = arith.constant 0 : i32
    %c0_i32_0 = arith.constant 0 : i32
    return %c0_i32, %arg1 : i32, i32
  }
  func.func @transform_13(%arg0: i32, %arg1: i32, %arg2: memref<1xi32, #tpu.memory_space<smem>>) -> (i32, i32) {
    %c0_i32 = arith.constant 0 : i32
    %c0_i32_0 = arith.constant 0 : i32
    return %arg0, %c0_i32 : i32, i32
  }
  func.func @transform_14(%arg0: i32, %arg1: i32, %arg2: memref<1xi32, #tpu.memory_space<smem>>) -> (i32, i32) {
    %c0_i32 = arith.constant 0 : i32
    return %arg0, %arg1 : i32, i32
  }
}

</mosaic_0001>

<llo_original>
// kernel: tpu_custom_call.1
$region0: #{tpu_custom_call.1}
  #allocation0 [shape = 'u32[]', space=smem, size = 0x4, offset = 0x4, fixed_abs, tag = 'smem constant byte address 0x4 - core index']
  #allocation1 [shape = 'u32[144,128]{1,0:T(1,128)}', space=vmem, size = 0x12000, scoped, tag = 'internal scratch']
  #allocation2 [shape = 'bf16[128,64]{1,0:T(16,128)(2,1)}', space=vmem, size = 0x8000, scoped, tag = 'scratch operand']
  #allocation3 [shape = 's32[1]{0}', space=sflag, size = 0x4, scoped, tag = 'scoped memory for tpu_custom_call.1']
  #allocation4 [shape = 's32[1]{0:T(128)S(6)}', space=smem, size = 0x200, scoped, tag = 'prefetched SMEM operand 0']
  %s0 = inlined_call_operand.<no memory space> [shape: s32[1], index: 0, kind: input, shape index: {}]
  %s1 = inlined_call_operand.hbm [shape: f32[256,256], index: 1, kind: input, shape index: {}]
  %s2 = inlined_call_operand.vmem [shape: bf16[256,64], index: 2, kind: input, shape index: {}]
  %s3 = inlined_call_operand.vmem [shape: f32[1,64], index: 3, kind: input, shape index: {}]
  %s4 = inlined_call_operand.vmem [shape: bf16[64,32], index: 4, kind: input, shape index: {}]
  %s5 = inlined_call_operand.vmem [shape: f32[1,32], index: 5, kind: input, shape index: {}]
  %s6 = inlined_call_operand.vmem [shape: bf16[32,16], index: 6, kind: input, shape index: {}]
  %s7 = inlined_call_operand.vmem [shape: f32[1,16], index: 7, kind: input, shape index: {}]
  %s8 = inlined_call_operand.vmem [shape: bf16[16,32], index: 8, kind: input, shape index: {}]
  %s9 = inlined_call_operand.vmem [shape: f32[1,32], index: 9, kind: input, shape index: {}]
  %s10 = inlined_call_operand.vmem [shape: bf16[32,64], index: 10, kind: input, shape index: {}]
  %s11 = inlined_call_operand.vmem [shape: f32[1,64], index: 11, kind: input, shape index: {}]
  %s12 = inlined_call_operand.vmem [shape: bf16[64,256], index: 12, kind: input, shape index: {}]
  %s13 = inlined_call_operand.vmem [shape: f32[1,256], index: 13, kind: input, shape index: {}]
  %s14 = inlined_call_operand.hbm [shape: f32[256,384], index: 14, kind: output, shape index: {0}]
  %s15 = inlined_call_operand.hbm [shape: bf16[256,256], index: 15, kind: output, shape index: {1}]
  %16 = xla_tuple %s14, %s15
  %s17 = sld [smem:[#allocation0]]
  $region101: #{tpu_custom_call.1} parent=0
    _
  %s19 = ssub.s32 1, %s17
  %s20 = scalar_select 0, %s19, %s17
  %21 = sst [smem:[#allocation4]] %s0
  $region1: #{tpu_custom_call.1} parent=0
    #allocation5 [shape = 'u8[262144]{0}', space=vmem, size = 0x40000, scoped, tag = 'input window, operand 1']
    #allocation6 [shape = 's32[2]{0}', space=sflag, size = 0x8, scoped, tag = 'scoped memory for tpu_custom_call.1']
    #allocation7 [shape = 's32[2]{0}', space=sflag, size = 0x8, scoped, tag = 'scoped memory for tpu_custom_call.1']
    #allocation8 [shape = 'u8[393216]{0}', space=vmem, size = 0x60000, scoped, tag = 'output window, operand 0']
    #allocation9 [shape = 'u8[131072]{0}', space=vmem, size = 0x20000, scoped, tag = 'output window, operand 1']
    #allocation10 [shape = 's32[2]{0}', space=sflag, size = 0x8, scoped, tag = 'scoped memory for tpu_custom_call.1']
    %22 = vsyncpa [#allocation6], 0
    %s23 = scalar_lea.sflag [#allocation6], 1
    %24 = vsyncpa %s23, 0
    %25 = vsyncpa [#allocation7], 0
    %s26 = scalar_lea.sflag [#allocation7], 1
    %27 = vsyncpa %s26, 0
    %28 = vsyncpa [#allocation10], 0
    %s29 = scalar_lea.sflag [#allocation10], 1
    %30 = vsyncpa %s29, 0
    loop: start=0, step=1, limit=4
    $region2: #{tpu_custom_call.1} parent=1 // loop_pre_header
      _
    $region3: #{tpu_custom_call.1} parent=1 // loop_header
      %s32 = sphi 0, %s36
      %p33 = scmp.ge.s32.totalorder %s32, 4
      %s39 = sphi 0, %s51
      %s40 = sphi 0, %s47
      %s41 = sphi 0, %s39
      %s42 = sphi 0, %s40
      %s43 = sphi 0, %s41
      %s44 = sphi 0, %s42
      %s54 = sphi 0, %s56
      %s57 = sphi 0, %s54
      %s58 = sphi 0, %s57
      %s74 = sphi 0, %s58
      %s78 = sphi 0, %s78
      %s80 = sphi 0, %s78
      %s81 = sphi 0, %s80
      %s95 = sphi 0, %s81
      %s99 = sphi 0, %s99
      %s101 = sphi 0, %s99
      %s102 = sphi 0, %s101
      %s116 = sphi 0, %s102
      %s120 = sphi 0, %s120
      %s122 = sphi 0, %s120
      %s123 = sphi 0, %s122
      %s137 = sphi 0, %s123
      %s141 = sphi 0, %s141
      %s143 = sphi 0, %s141
      %s144 = sphi 0, %s143
      %s158 = sphi 0, %s144
      %s162 = sphi 0, %s162
      %s164 = sphi 0, %s162
      %s165 = sphi 0, %s164
      %s179 = sphi 0, %s165
      %s183 = sphi 0, %s183
      %s185 = sphi 0, %s183
      %s186 = sphi 0, %s185
      %s200 = sphi 0, %s186
      %s204 = sphi 0, %s204
      %s206 = sphi 0, %s204
      %s207 = sphi 0, %s206
      %s221 = sphi 0, %s207
      %s225 = sphi 0, %s225
      %s227 = sphi 0, %s225
      %s228 = sphi 0, %s227
      %s242 = sphi 0, %s228
      %s246 = sphi 0, %s246
      %s248 = sphi 0, %s246
      %s249 = sphi 0, %s248
      %s263 = sphi 0, %s249
      %s267 = sphi 0, %s267
      %s269 = sphi 0, %s267
      %s270 = sphi 0, %s269
      %s284 = sphi 0, %s270
      %s290 = sphi 0, %s292
      %s293 = sphi 0, %s290
      %s294 = sphi 0, %s293
      %s310 = sphi 0, %s294
      %s316 = sphi 0, %s318
      %s319 = sphi 0, %s316
      %s320 = sphi 0, %s319
      %s336 = sphi 0, %s320
      %s342 = sphi 0, %s344
      %s345 = sphi 0, %s342
      %s346 = sphi 0, %s345
      %s362 = sphi 0, %s346
      %s370 = sphi 0, %s372
      %s373 = sphi 0, %s370
      %s374 = sphi 0, %s373
      %s390 = sphi 0, %s374
    $region4: #{tpu_custom_call.1} parent=1 // loop_header_branch
      %35 = sbr.rel (%p33) target = $region8
    $region5: #{tpu_custom_call.1} parent=1 // loop_body
      %s37 = ssub.s32 %s32, 1
      %s38 = ssub.s32 %s32, 2
      %s45 = sadd.s32 1, %s40
      %p46 = scmp.ge.s32.totalorder %s45, 1
      %s47 = scalar_select %p46, 0, %s45
      %s48 = sadd.s32 1, %s39
      %s49 = scalar_select %p46, %s48, %s39
      %p50 = scmp.ge.s32.totalorder %s49, 2
      %s51 = scalar_select %p50, 0, %s49
      %s52 = ssub.s32 %s39, %s51
      %p53 = scmp.eq.s32.totalorder %s52, 0
      %s55 = sadd.s32 %s54, 1
      %s56 = scalar_select %p53, %s54, %s55
      %p59 = pneg %p53
      %p60 = scmp.eq.s32.totalorder %s32, 1
      %p61 = por %p59, %p60
      %p62 = scmp.ne.s32.totalorder %s54, %s57
      %p63 = scmp.eq.s32.totalorder %s32, 0
      %p64 = por %p62, %p63
      %p65 = scmp.ne.s32.totalorder %s54, %s57
      %p66 = scmp.eq.s32.totalorder %s37, 1
      %p67 = por %p65, %p66
      %p68 = scmp.ne.s32.totalorder %s57, %s58
      %p69 = scmp.eq.s32.totalorder %s37, 0
      %p70 = por %p68, %p69
      %p71 = scmp.ne.s32.totalorder %s57, %s58
      %p72 = scmp.eq.s32.totalorder %s38, 1
      %p73 = por %p71, %p72
      %p75 = scmp.ne.s32.totalorder %s58, %s74
      %p76 = scmp.eq.s32.totalorder %s38, 0
      %p77 = por %p75, %p76
      %s79 = sadd.s32 %s78, 1
      %p82 = scmp.eq.s32.totalorder %s32, 1
      %p83 = scmp.ne.s32.totalorder %s78, %s80
      %p84 = scmp.eq.s32.totalorder %s32, 0
      %p85 = por %p83, %p84
      %p86 = scmp.ne.s32.totalorder %s78, %s80
      %p87 = scmp.eq.s32.totalorder %s37, 1
      %p88 = por %p86, %p87
      %p89 = scmp.ne.s32.totalorder %s80, %s81
      %p90 = scmp.eq.s32.totalorder %s37, 0
      %p91 = por %p89, %p90
      %p92 = scmp.ne.s32.totalorder %s80, %s81
      %p93 = scmp.eq.s32.totalorder %s38, 1
      %p94 = por %p92, %p93
      %p96 = scmp.ne.s32.totalorder %s81, %s95
      %p97 = scmp.eq.s32.totalorder %s38, 0
      %p98 = por %p96, %p97
      %s100 = sadd.s32 %s99, 1
      %p103 = scmp.eq.s32.totalorder %s32, 1
      %p104 = scmp.ne.s32.totalorder %s99, %s101
      %p105 = scmp.eq.s32.totalorder %s32, 0
      %p106 = por %p104, %p105
      %p107 = scmp.ne.s32.totalorder %s99, %s101
      %p108 = scmp.eq.s32.totalorder %s37, 1
      %p109 = por %p107, %p108
      %p110 = scmp.ne.s32.totalorder %s101, %s102
      %p111 = scmp.eq.s32.totalorder %s37, 0
      %p112 = por %p110, %p111
      %p113 = scmp.ne.s32.totalorder %s101, %s102
      %p114 = scmp.eq.s32.totalorder %s38, 1
      %p115 = por %p113, %p114
      %p117 = scmp.ne.s32.totalorder %s102, %s116
      %p118 = scmp.eq.s32.totalorder %s38, 0
      %p119 = por %p117, %p118
      %s121 = sadd.s32 %s120, 1
      %p124 = scmp.eq.s32.totalorder %s32, 1
      %p125 = scmp.ne.s32.totalorder %s120, %s122
      %p126 = scmp.eq.s32.totalorder %s32, 0
      %p127 = por %p125, %p126
      %p128 = scmp.ne.s32.totalorder %s120, %s122
      %p129 = scmp.eq.s32.totalorder %s37, 1
      %p130 = por %p128, %p129
      %p131 = scmp.ne.s32.totalorder %s122, %s123
      %p132 = scmp.eq.s32.totalorder %s37, 0
      %p133 = por %p131, %p132
      %p134 = scmp.ne.s32.totalorder %s122, %s123
      %p135 = scmp.eq.s32.totalorder %s38, 1
      %p136 = por %p134, %p135
      %p138 = scmp.ne.s32.totalorder %s123, %s137
      %p139 = scmp.eq.s32.totalorder %s38, 0
      %p140 = por %p138, %p139
      %s142 = sadd.s32 %s141, 1
      %p145 = scmp.eq.s32.totalorder %s32, 1
      %p146 = scmp.ne.s32.totalorder %s141, %s143
      %p147 = scmp.eq.s32.totalorder %s32, 0
      %p148 = por %p146, %p147
      %p149 = scmp.ne.s32.totalorder %s141, %s143
      %p150 = scmp.eq.s32.totalorder %s37, 1
      %p151 = por %p149, %p150
      %p152 = scmp.ne.s32.totalorder %s143, %s144
      %p153 = scmp.eq.s32.totalorder %s37, 0
      %p154 = por %p152, %p153
      %p155 = scmp.ne.s32.totalorder %s143, %s144
      %p156 = scmp.eq.s32.totalorder %s38, 1
      %p157 = por %p155, %p156
      %p159 = scmp.ne.s32.totalorder %s144, %s158
      %p160 = scmp.eq.s32.totalorder %s38, 0
      %p161 = por %p159, %p160
      %s163 = sadd.s32 %s162, 1
      %p166 = scmp.eq.s32.totalorder %s32, 1
      %p167 = scmp.ne.s32.totalorder %s162, %s164
      %p168 = scmp.eq.s32.totalorder %s32, 0
      %p169 = por %p167, %p168
      %p170 = scmp.ne.s32.totalorder %s162, %s164
      %p171 = scmp.eq.s32.totalorder %s37, 1
      %p172 = por %p170, %p171
      %p173 = scmp.ne.s32.totalorder %s164, %s165
      %p174 = scmp.eq.s32.totalorder %s37, 0
      %p175 = por %p173, %p174
      %p176 = scmp.ne.s32.totalorder %s164, %s165
      %p177 = scmp.eq.s32.totalorder %s38, 1
      %p178 = por %p176, %p177
      %p180 = scmp.ne.s32.totalorder %s165, %s179
      %p181 = scmp.eq.s32.totalorder %s38, 0
      %p182 = por %p180, %p181
      %s184 = sadd.s32 %s183, 1
      %p187 = scmp.eq.s32.totalorder %s32, 1
      %p188 = scmp.ne.s32.totalorder %s183, %s185
      %p189 = scmp.eq.s32.totalorder %s32, 0
      %p190 = por %p188, %p189
      %p191 = scmp.ne.s32.totalorder %s183, %s185
      %p192 = scmp.eq.s32.totalorder %s37, 1
      %p193 = por %p191, %p192
      %p194 = scmp.ne.s32.totalorder %s185, %s186
      %p195 = scmp.eq.s32.totalorder %s37, 0
      %p196 = por %p194, %p195
      %p197 = scmp.ne.s32.totalorder %s185, %s186
      %p198 = scmp.eq.s32.totalorder %s38, 1
      %p199 = por %p197, %p198
      %p201 = scmp.ne.s32.totalorder %s186, %s200
      %p202 = scmp.eq.s32.totalorder %s38, 0
      %p203 = por %p201, %p202
      %s205 = sadd.s32 %s204, 1
      %p208 = scmp.eq.s32.totalorder %s32, 1
      %p209 = scmp.ne.s32.totalorder %s204, %s206
      %p210 = scmp.eq.s32.totalorder %s32, 0
      %p211 = por %p209, %p210
      %p212 = scmp.ne.s32.totalorder %s204, %s206
      %p213 = scmp.eq.s32.totalorder %s37, 1
      %p214 = por %p212, %p213
      %p215 = scmp.ne.s32.totalorder %s206, %s207
      %p216 = scmp.eq.s32.totalorder %s37, 0
      %p217 = por %p215, %p216
      %p218 = scmp.ne.s32.totalorder %s206, %s207
      %p219 = scmp.eq.s32.totalorder %s38, 1
      %p220 = por %p218, %p219
      %p222 = scmp.ne.s32.totalorder %s207, %s221
      %p223 = scmp.eq.s32.totalorder %s38, 0
      %p224 = por %p222, %p223
      %s226 = sadd.s32 %s225, 1
      %p229 = scmp.eq.s32.totalorder %s32, 1
      %p230 = scmp.ne.s32.totalorder %s225, %s227
      %p231 = scmp.eq.s32.totalorder %s32, 0
      %p232 = por %p230, %p231
      %p233 = scmp.ne.s32.totalorder %s225, %s227
      %p234 = scmp.eq.s32.totalorder %s37, 1
      %p235 = por %p233, %p234
      %p236 = scmp.ne.s32.totalorder %s227, %s228
      %p237 = scmp.eq.s32.totalorder %s37, 0
      %p238 = por %p236, %p237
      %p239 = scmp.ne.s32.totalorder %s227, %s228
      %p240 = scmp.eq.s32.totalorder %s38, 1
      %p241 = por %p239, %p240
      %p243 = scmp.ne.s32.totalorder %s228, %s242
      %p244 = scmp.eq.s32.totalorder %s38, 0
      %p245 = por %p243, %p244
      %s247 = sadd.s32 %s246, 1
      %p250 = scmp.eq.s32.totalorder %s32, 1
      %p251 = scmp.ne.s32.totalorder %s246, %s248
      %p252 = scmp.eq.s32.totalorder %s32, 0
      %p253 = por %p251, %p252
      %p254 = scmp.ne.s32.totalorder %s246, %s248
      %p255 = scmp.eq.s32.totalorder %s37, 1
      %p256 = por %p254, %p255
      %p257 = scmp.ne.s32.totalorder %s248, %s249
      %p258 = scmp.eq.s32.totalorder %s37, 0
      %p259 = por %p257, %p258
      %p260 = scmp.ne.s32.totalorder %s248, %s249
      %p261 = scmp.eq.s32.totalorder %s38, 1
      %p262 = por %p260, %p261
      %p264 = scmp.ne.s32.totalorder %s249, %s263
      %p265 = scmp.eq.s32.totalorder %s38, 0
      %p266 = por %p264, %p265
      %s268 = sadd.s32 %s267, 1
      %p271 = scmp.eq.s32.totalorder %s32, 1
      %p272 = scmp.ne.s32.totalorder %s267, %s269
      %p273 = scmp.eq.s32.totalorder %s32, 0
      %p274 = por %p272, %p273
      %p275 = scmp.ne.s32.totalorder %s267, %s269
      %p276 = scmp.eq.s32.totalorder %s37, 1
      %p277 = por %p275, %p276
      %p278 = scmp.ne.s32.totalorder %s269, %s270
      %p279 = scmp.eq.s32.totalorder %s37, 0
      %p280 = por %p278, %p279
      %p281 = scmp.ne.s32.totalorder %s269, %s270
      %p282 = scmp.eq.s32.totalorder %s38, 1
      %p283 = por %p281, %p282
      %p285 = scmp.ne.s32.totalorder %s270, %s284
      %p286 = scmp.eq.s32.totalorder %s38, 0
      %p287 = por %p285, %p286
      %s288 = ssub.s32 %s40, %s47
      %p289 = scmp.eq.s32.totalorder %s288, 0
      %s291 = sadd.s32 %s290, 1
      %s292 = scalar_select %p289, %s290, %s291
      %p295 = pneg %p289
      %p296 = scmp.eq.s32.totalorder %s32, 1
      %p297 = por %p295, %p296
      %p298 = scmp.ne.s32.totalorder %s290, %s293
      %p299 = scmp.eq.s32.totalorder %s32, 0
      %p300 = por %p298, %p299
      %p301 = scmp.ne.s32.totalorder %s290, %s293
      %p302 = scmp.eq.s32.totalorder %s37, 1
      %p303 = por %p301, %p302
      %p304 = scmp.ne.s32.totalorder %s293, %s294
      %p305 = scmp.eq.s32.totalorder %s37, 0
      %p306 = por %p304, %p305
      %p307 = scmp.ne.s32.totalorder %s293, %s294
      %p308 = scmp.eq.s32.totalorder %s38, 1
      %p309 = por %p307, %p308
      %p311 = scmp.ne.s32.totalorder %s294, %s310
      %p312 = scmp.eq.s32.totalorder %s38, 0
      %p313 = por %p311, %p312
      %s314 = ssub.s32 %s40, %s47
      %p315 = scmp.eq.s32.totalorder %s314, 0
      %s317 = sadd.s32 %s316, 1
      %s318 = scalar_select %p315, %s316, %s317
      %p321 = pneg %p315
      %p322 = scmp.eq.s32.totalorder %s32, 1
      %p323 = por %p321, %p322
      %p324 = scmp.ne.s32.totalorder %s316, %s319
      %p325 = scmp.eq.s32.totalorder %s32, 0
      %p326 = por %p324, %p325
      %p327 = scmp.ne.s32.totalorder %s316, %s319
      %p328 = scmp.eq.s32.totalorder %s37, 1
      %p329 = por %p327, %p328
      %p330 = scmp.ne.s32.totalorder %s319, %s320
      %p331 = scmp.eq.s32.totalorder %s37, 0
      %p332 = por %p330, %p331
      %p333 = scmp.ne.s32.totalorder %s319, %s320
      %p334 = scmp.eq.s32.totalorder %s38, 1
      %p335 = por %p333, %p334
      %p337 = scmp.ne.s32.totalorder %s320, %s336
      %p338 = scmp.eq.s32.totalorder %s38, 0
      %p339 = por %p337, %p338
      %s340 = ssub.s32 %s39, %s51
      %p341 = scmp.eq.s32.totalorder %s340, 0
      %s343 = sadd.s32 %s342, 1
      %s344 = scalar_select %p341, %s342, %s343
      %p347 = pneg %p341
      %p348 = scmp.eq.s32.totalorder %s32, 1
      %p349 = por %p347, %p348
      %p350 = scmp.ne.s32.totalorder %s342, %s345
      %p351 = scmp.eq.s32.totalorder %s32, 0
      %p352 = por %p350, %p351
      %p353 = scmp.ne.s32.totalorder %s342, %s345
      %p354 = scmp.eq.s32.totalorder %s37, 1
      %p355 = por %p353, %p354
      %p356 = scmp.ne.s32.totalorder %s345, %s346
      %p357 = scmp.eq.s32.totalorder %s37, 0
      %p358 = por %p356, %p357
      %p359 = scmp.ne.s32.totalorder %s345, %s346
      %p360 = scmp.eq.s32.totalorder %s38, 1
      %p361 = por %p359, %p360
      %p363 = scmp.ne.s32.totalorder %s346, %s362
      %p364 = scmp.eq.s32.totalorder %s38, 0
      %p365 = por %p363, %p364
      %s366 = ssub.s32 %s39, %s51
      %s367 = ssub.s32 %s40, %s47
      %s368 = sor.u32 %s366, %s367
      %p369 = scmp.eq.s32.totalorder %s368, 0
      %s371 = sadd.s32 %s370, 1
      %s372 = scalar_select %p369, %s370, %s371
      %p375 = pneg %p369
      %p376 = scmp.eq.s32.totalorder %s32, 1
      %p377 = por %p375, %p376
      %p378 = scmp.ne.s32.totalorder %s370, %s373
      %p379 = scmp.eq.s32.totalorder %s32, 0
      %p380 = por %p378, %p379
      %p381 = scmp.ne.s32.totalorder %s370, %s373
      %p382 = scmp.eq.s32.totalorder %s37, 1
      %p383 = por %p381, %p382
      %p384 = scmp.ne.s32.totalorder %s373, %s374
      %p385 = scmp.eq.s32.totalorder %s37, 0
      %p386 = por %p384, %p385
      %p387 = scmp.ne.s32.totalorder %s373, %s374
      %p388 = scmp.eq.s32.totalorder %s38, 1
      %p389 = por %p387, %p388
      %p391 = scmp.ne.s32.totalorder %s374, %s390
      %p392 = scmp.eq.s32.totalorder %s38, 0
      %p393 = por %p391, %p392
      %p394 = scmp.le.s32.totalorder 1, %s32
      %p395 = scmp.lt.s32.totalorder %s32, 3
      %p396 = pnand %p394, %p395
      %p397 = pneg %p396
      // Predicated region
      $region9: #{tpu_custom_call.1} parent=5 // pred_check
        _
      $region10: #{tpu_custom_call.1} parent=5 // pred_check_branch
        %399 = sbr.rel (%p396) target = $region12
      $region11: #{tpu_custom_call.1} parent=5 // pred_region
        %s400 = ssub.s32 %s32, 1
        // Predicated region
        $region13: #{tpu_custom_call.1} parent=11 // pred_check
          %p401 = pneg %p91
        $region14: #{tpu_custom_call.1} parent=11 // pred_check_branch
          %403 = sbr.rel (%p401) target = $region16
        $region15: #{tpu_custom_call.1} parent=11 // pred_region
          _
        $region16: #{tpu_custom_call.1} parent=11 // pred_fallthru
          _
        // Predicated region
        $region17: #{tpu_custom_call.1} parent=11 // pred_check
          %p404 = pneg %p112
        $region18: #{tpu_custom_call.1} parent=11 // pred_check_branch
          %406 = sbr.rel (%p404) target = $region20
        $region19: #{tpu_custom_call.1} parent=11 // pred_region
          _
        $region20: #{tpu_custom_call.1} parent=11 // pred_fallthru
          _
        // Predicated region
        $region21: #{tpu_custom_call.1} parent=11 // pred_check
          %p407 = pneg %p133
        $region22: #{tpu_custom_call.1} parent=11 // pred_check_branch
          %409 = sbr.rel (%p407) target = $region24
        $region23: #{tpu_custom_call.1} parent=11 // pred_region
          _
        $region24: #{tpu_custom_call.1} parent=11 // pred_fallthru
          _
        // Predicated region
        $region25: #{tpu_custom_call.1} parent=11 // pred_check
          %p410 = pneg %p154
        $region26: #{tpu_custom_call.1} parent=11 // pred_check_branch
          %412 = sbr.rel (%p410) target = $region28
        $region27: #{tpu_custom_call.1} parent=11 // pred_region
          _
        $region28: #{tpu_custom_call.1} parent=11 // pred_fallthru
          _
        // Predicated region
        $region29: #{tpu_custom_call.1} parent=11 // pred_check
          %p413 = pneg %p175
        $region30: #{tpu_custom_call.1} parent=11 // pred_check_branch
          %415 = sbr.rel (%p413) target = $region32
        $region31: #{tpu_custom_call.1} parent=11 // pred_region
          _
        $region32: #{tpu_custom_call.1} parent=11 // pred_fallthru
          _
        // Predicated region
        $region33: #{tpu_custom_call.1} parent=11 // pred_check
          %p416 = pneg %p196
        $region34: #{tpu_custom_call.1} parent=11 // pred_check_branch
          %418 = sbr.rel (%p416) target = $region36
        $region35: #{tpu_custom_call.1} parent=11 // pred_region
          _
        $region36: #{tpu_custom_call.1} parent=11 // pred_fallthru
          _
        // Predicated region
        $region37: #{tpu_custom_call.1} parent=11 // pred_check
          %p419 = pneg %p217
        $region38: #{tpu_custom_call.1} parent=11 // pred_check_branch
          %421 = sbr.rel (%p419) target = $region40
        $region39: #{tpu_custom_call.1} parent=11 // pred_region
          _
        $region40: #{tpu_custom_call.1} parent=11 // pred_fallthru
          _
        // Predicated region
        $region41: #{tpu_custom_call.1} parent=11 // pred_check
          %p422 = pneg %p238
        $region42: #{tpu_custom_call.1} parent=11 // pred_check_branch
          %424 = sbr.rel (%p422) target = $region44
        $region43: #{tpu_custom_call.1} parent=11 // pred_region
          _
        $region44: #{tpu_custom_call.1} parent=11 // pred_fallthru
          _
        // Predicated region
        $region45: #{tpu_custom_call.1} parent=11 // pred_check
          %p425 = pneg %p259
        $region46: #{tpu_custom_call.1} parent=11 // pred_check_branch
          %427 = sbr.rel (%p425) target = $region48
        $region47: #{tpu_custom_call.1} parent=11 // pred_region
          _
        $region48: #{tpu_custom_call.1} parent=11 // pred_fallthru
          _
        // Predicated region
        $region49: #{tpu_custom_call.1} parent=11 // pred_check
          %p428 = pneg %p280
        $region50: #{tpu_custom_call.1} parent=11 // pred_check_branch
          %430 = sbr.rel (%p428) target = $region52
        $region51: #{tpu_custom_call.1} parent=11 // pred_region
          _
        $region52: #{tpu_custom_call.1} parent=11 // pred_fallthru
          _
        // Predicated region
        $region53: #{tpu_custom_call.1} parent=11 // pred_check
          %p431 = pneg %p306
        $region54: #{tpu_custom_call.1} parent=11 // pred_check_branch
          %433 = sbr.rel (%p431) target = $region56
        $region55: #{tpu_custom_call.1} parent=11 // pred_region
          %s434 = smul.u32 2, %s42
          %p435 = scmp.lt.s32.totalorder %s434, 1
          %s436 = scalar_select %p435, %s434, 1
          %s437 = smul.addr %s436, 4
          %s438 = scalar_lea.vmem %s12, %s437
          %s439 = smul.u32 2, %s42
        $region56: #{tpu_custom_call.1} parent=11 // pred_fallthru
          _
        // Predicated region
        $region57: #{tpu_custom_call.1} parent=11 // pred_check
          %p440 = pneg %p332
        $region58: #{tpu_custom_call.1} parent=11 // pred_check_branch
          %442 = sbr.rel (%p440) target = $region60
        $region59: #{tpu_custom_call.1} parent=11 // pred_region
          %s443 = smul.u32 2, %s42
          %p444 = scmp.lt.s32.totalorder %s443, 1
          %s445 = scalar_select %p444, %s443, 1
          %s446 = scalar_lea.vmem %s13, %s445
          %s447 = smul.u32 2, %s42
        $region60: #{tpu_custom_call.1} parent=11 // pred_fallthru
          _
      $region12: #{tpu_custom_call.1} parent=5 // pred_fallthru
        _
      %p448 = scmp.lt.s32.totalorder %s32, 2
      // Predicated region
      $region61: #{tpu_custom_call.1} parent=5 // pred_check
        %p449 = pneg %p448
      $region62: #{tpu_custom_call.1} parent=5 // pred_check_branch
        %451 = sbr.rel (%p449) target = $region64
      $region63: #{tpu_custom_call.1} parent=5 // pred_region
        // Predicated region
        $region65: #{tpu_custom_call.1} parent=63 // pred_check
          %p452 = pneg %p64
        $region66: #{tpu_custom_call.1} parent=63 // pred_check_branch
          %454 = sbr.rel (%p452) target = $region68
        $region67: #{tpu_custom_call.1} parent=63 // pred_region
          %s455 = sand.u32 %s54, 1
          %s456 = scalar_lea.sflag [#allocation6], %s455
          %s457 = sand.u32 %s54, 1
          %s458 = smul.addr %s457, 256
          %s459 = scalar_lea.vmem [#allocation5], %s458
          %s460 = smul.u32 16, %s39
          %s462 = ssub.s32 4096, 4096
          %463 = vsyncadd %s456, %s462
          %s464 = smul.addr %s460, 2
          %s465 = smul.addr %s464, 128
          %s466 = scalar_lea.hbm %s1, %s465
          %s467 = sshll.u32 %s459, 4
          %s468 = int_to_ptr.vmem [resolvable:$true] %s467
          %473 = dma.hbm_to_vmem [thread:$0]  %s466, 4096, %s468, %s456, 256, 256, 16
        $region68: #{tpu_custom_call.1} parent=63 // pred_fallthru
          _
      $region64: #{tpu_custom_call.1} parent=5 // pred_fallthru
        _
      %p474 = scmp.le.s32.totalorder 1, %s32
      %p475 = scmp.lt.s32.totalorder %s32, 3
      %p476 = pnand %p474, %p475
      %p477 = pneg %p476
      // Predicated region
      $region69: #{tpu_custom_call.1} parent=5 // pred_check
        _
      $region70: #{tpu_custom_call.1} parent=5 // pred_check_branch
        %479 = sbr.rel (%p476) target = $region72
      $region71: #{tpu_custom_call.1} parent=5 // pred_region
        %s480 = ssub.s32 %s32, 1
        %s481 = sand.u32 %s57, 1
        %s482 = scalar_lea.sflag [#allocation6], %s481
        %s483 = sand.u32 %s57, 1
        %s484 = smul.addr %s483, 256
        %s485 = scalar_lea.vmem [#allocation5], %s484
        // Predicated region
        $region73: #{tpu_custom_call.1} parent=71 // pred_check
          %p486 = pneg %p70
        $region74: #{tpu_custom_call.1} parent=71 // pred_check_branch
          %488 = sbr.rel (%p486) target = $region76
        $region75: #{tpu_custom_call.1} parent=71 // pred_region
          %489 = dma.done %s482, 4096
        $region76: #{tpu_custom_call.1} parent=71 // pred_fallthru
          _
        %s490 = sand.u32 %s57, 1
        %s491 = scalar_lea.sflag [#allocation6], %s490
        %s492 = sand.u32 %s57, 1
        %s493 = smul.addr %s492, 256
        %s494 = scalar_lea.vmem [#allocation5], %s493
        %p495 = pneg %p70
        %p496 = pneg %p67
        %p497 = pneg %p91
        %p498 = pneg %p88
        %p499 = pneg %p112
        %p500 = pneg %p109
        %p501 = pneg %p133
        %p502 = pneg %p130
        %p503 = pneg %p154
        %p504 = pneg %p151
        %p505 = pneg %p175
        %p506 = pneg %p172
        %p507 = pneg %p196
        %p508 = pneg %p193
        %p509 = pneg %p217
        %p510 = pneg %p214
        %p511 = pneg %p238
        %p512 = pneg %p235
        %p513 = pneg %p259
        %p514 = pneg %p256
        %p515 = pneg %p280
        %p516 = pneg %p277
        %s517 = smul.u32 2, %s42
        %p518 = scmp.lt.s32.totalorder %s517, 1
        %s519 = scalar_select %p518, %s517, 1
        %s520 = smul.addr %s519, 4
        %s521 = scalar_lea.vmem %s12, %s520
        %p522 = pneg %p306
        %p523 = pneg %p303
        %s524 = smul.u32 2, %s42
        %p525 = scmp.lt.s32.totalorder %s524, 1
        %s526 = scalar_select %p525, %s524, 1
        %s527 = scalar_lea.vmem %s13, %s526
        %p528 = pneg %p332
        %p529 = pneg %p329
        %p530 = pneg %p358
        %p531 = pneg %p355
        %s532 = sand.u32 %s345, 1
        %s533 = scalar_lea.sflag [#allocation7], %s532
        %s534 = sand.u32 %s345, 1
        %s535 = smul.addr %s534, 384
        %s536 = scalar_lea.vmem [#allocation8], %s535
        %p537 = pneg %p386
        %p538 = pneg %p383
        %s539 = sand.u32 %s373, 1
        %s540 = scalar_lea.sflag [#allocation10], %s539
        %s541 = sand.u32 %s373, 1
        %s542 = smul.addr %s541, 128
        %s543 = scalar_lea.vmem [#allocation9], %s542
        %s544 = smul.u32 16, %s41
        %s545 = smul.u32 2, %s42
        %p546 = scmp.lt.s32.totalorder %s545, 1
        %s547 = scalar_select %p546, %s545, 1
        %s548 = smul.addr %s547, 4
        %s549 = scalar_lea.vmem %s12, %s548
        %s550 = smul.u32 2, %s42
        %s551 = smul.u32 2, %s42
        %p552 = scmp.lt.s32.totalorder %s551, 1
        %s553 = scalar_select %p552, %s551, 1
        %s554 = scalar_lea.vmem %s13, %s553
        %s555 = smul.u32 2, %s42
        %s556 = smul.u32 16, %s41
        %s557 = smul.u32 16, %s41
        %s558 = smul.u32 2, %s42
        %p561 = scmp.eq.s32.totalorder %s42, 0
        // Predicated region
        $region77: #{tpu_custom_call.1} parent=71 // pred_check
          %p562 = pneg %p561
        $region78: #{tpu_custom_call.1} parent=71 // pred_check_branch
          %564 = sbr.rel (%p562) target = $region80
        $region79: #{tpu_custom_call.1} parent=71 // pred_region
          %v565 = vld [vmem:[%s485] sm:$0xff]
          %v566 = vld [vmem:[%s485 + $0x8] sm:$0xff]
          %v567 = vld [vmem:[%s485 + $0x10] sm:$0xff]
          %v568 = vld [vmem:[%s485 + $0x18] sm:$0xff]
          %v569 = vld [vmem:[%s485 + $0x20] sm:$0xff]
          %v570 = vld [vmem:[%s485 + $0x28] sm:$0xff]
          %v571 = vld [vmem:[%s485 + $0x30] sm:$0xff]
          %v572 = vld [vmem:[%s485 + $0x38] sm:$0xff]
          %v573 = vld [vmem:[%s485 + $0x40] sm:$0xff]
          %v574 = vld [vmem:[%s485 + $0x48] sm:$0xff]
          %v575 = vld [vmem:[%s485 + $0x50] sm:$0xff]
          %v576 = vld [vmem:[%s485 + $0x58] sm:$0xff]
          %v577 = vld [vmem:[%s485 + $0x60] sm:$0xff]
          %v578 = vld [vmem:[%s485 + $0x68] sm:$0xff]
          %v579 = vld [vmem:[%s485 + $0x70] sm:$0xff]
          %v580 = vld [vmem:[%s485 + $0x78] sm:$0xff]
          %v581 = vld [vmem:[%s485 + $0x80] sm:$0xff]
          %v582 = vld [vmem:[%s485 + $0x88] sm:$0xff]
          %v583 = vld [vmem:[%s485 + $0x90] sm:$0xff]
          %v584 = vld [vmem:[%s485 + $0x98] sm:$0xff]
          %v585 = vld [vmem:[%s485 + $0xa0] sm:$0xff]
          %v586 = vld [vmem:[%s485 + $0xa8] sm:$0xff]
          %v587 = vld [vmem:[%s485 + $0xb0] sm:$0xff]
          %v588 = vld [vmem:[%s485 + $0xb8] sm:$0xff]
          %v589 = vld [vmem:[%s485 + $0xc0] sm:$0xff]
          %v590 = vld [vmem:[%s485 + $0xc8] sm:$0xff]
          %v591 = vld [vmem:[%s485 + $0xd0] sm:$0xff]
          %v592 = vld [vmem:[%s485 + $0xd8] sm:$0xff]
          %v593 = vld [vmem:[%s485 + $0xe0] sm:$0xff]
          %v594 = vld [vmem:[%s485 + $0xe8] sm:$0xff]
          %v595 = vld [vmem:[%s485 + $0xf0] sm:$0xff]
          %v596 = vld [vmem:[%s485 + $0xf8] sm:$0xff]
          %v597 = vpack.c.bf16 %v567, %v565
          %v598 = vpack.c.bf16 %v568, %v566
          %v599 = vpack.c.bf16 %v571, %v569
          %v600 = vpack.c.bf16 %v572, %v570
          %v601 = vpack.c.bf16 %v575, %v573
          %v602 = vpack.c.bf16 %v576, %v574
          %v603 = vpack.c.bf16 %v579, %v577
          %v604 = vpack.c.bf16 %v580, %v578
          %v605 = vpack.c.bf16 %v583, %v581
          %v606 = vpack.c.bf16 %v584, %v582
          %v607 = vpack.c.bf16 %v587, %v585
          %v608 = vpack.c.bf16 %v588, %v586
          %v609 = vpack.c.bf16 %v591, %v589
          %v610 = vpack.c.bf16 %v592, %v590
          %v611 = vpack.c.bf16 %v595, %v593
          %v612 = vpack.c.bf16 %v596, %v594
          %v613 = vld [vmem:[%s2] sm:$0xf]
          %v614 = vld [vmem:[%s2 + $0x4] sm:$0xf]
          %v615 = vld [vmem:[%s2 + $0x8] sm:$0xf]
          %v616 = vld [vmem:[%s2 + $0xc] sm:$0xf]
          %v617 = vld [vmem:[%s2 + $0x10] sm:$0xf]
          %v618 = vld [vmem:[%s2 + $0x14] sm:$0xf]
          %v619 = vld [vmem:[%s2 + $0x18] sm:$0xf]
          %v620 = vld [vmem:[%s2 + $0x1c] sm:$0xf]
          %v621 = vld [vmem:[%s2 + $0x20] sm:$0xf]
          %v622 = vld [vmem:[%s2 + $0x24] sm:$0xf]
          %v623 = vld [vmem:[%s2 + $0x28] sm:$0xf]
          %v624 = vld [vmem:[%s2 + $0x2c] sm:$0xf]
          %v625 = vld [vmem:[%s2 + $0x30] sm:$0xf]
          %v626 = vld [vmem:[%s2 + $0x34] sm:$0xf]
          %v627 = vld [vmem:[%s2 + $0x38] sm:$0xf]
          %v628 = vld [vmem:[%s2 + $0x3c] sm:$0xf]
          %v629 = vld [vmem:[%s2 + $0x40] sm:$0xf]
          %v630 = vld [vmem:[%s2 + $0x44] sm:$0xf]
          %v631 = vld [vmem:[%s2 + $0x48] sm:$0xf]
          %v632 = vld [vmem:[%s2 + $0x4c] sm:$0xf]
          %v633 = vld [vmem:[%s2 + $0x50] sm:$0xf]
          %v634 = vld [vmem:[%s2 + $0x54] sm:$0xf]
          %v635 = vld [vmem:[%s2 + $0x58] sm:$0xf]
          %v636 = vld [vmem:[%s2 + $0x5c] sm:$0xf]
          %v637 = vld [vmem:[%s2 + $0x60] sm:$0xf]
          %v638 = vld [vmem:[%s2 + $0x64] sm:$0xf]
          %v639 = vld [vmem:[%s2 + $0x68] sm:$0xf]
          %v640 = vld [vmem:[%s2 + $0x6c] sm:$0xf]
          %v641 = vld [vmem:[%s2 + $0x70] sm:$0xf]
          %v642 = vld [vmem:[%s2 + $0x74] sm:$0xf]
          %v643 = vld [vmem:[%s2 + $0x78] sm:$0xf]
          %v644 = vld [vmem:[%s2 + $0x7c] sm:$0xf]
          %v645 = vld [vmem:[%s3] sm:$0x1]
          %v647 = vlaneseq
          %v648 = vshrl.u32 %v647, 7
          %v649 = vsub.s32 0, %v648
          %v650 = vrot.slane %v645, %v649
          %v684 = vunpack.c.l.b16 %v613
          %v685 = vunpack.c.l.b16 %v614
          %v686 = vunpack.c.l.b16 %v615
          %v687 = vunpack.c.l.b16 %v616
          %v688 = vunpack.c.l.b16 %v617
          %v689 = vunpack.c.l.b16 %v618
          %v690 = vunpack.c.l.b16 %v619
          %v691 = vunpack.c.l.b16 %v620
          %v692 = vunpack.c.l.b16 %v621
          %v693 = vunpack.c.l.b16 %v622
          %v694 = vunpack.c.l.b16 %v623
          %v695 = vunpack.c.l.b16 %v624
          %v696 = vunpack.c.l.b16 %v625
          %v697 = vunpack.c.l.b16 %v626
          %v698 = vunpack.c.l.b16 %v627
          %v699 = vunpack.c.l.b16 %v628
          %v700 = vunpack.c.l.b16 %v629
          %v701 = vunpack.c.l.b16 %v630
          %v702 = vunpack.c.l.b16 %v631
          %v703 = vunpack.c.l.b16 %v632
          %v704 = vunpack.c.l.b16 %v633
          %v705 = vunpack.c.l.b16 %v634
          %v706 = vunpack.c.l.b16 %v635
          %v707 = vunpack.c.l.b16 %v636
          %v708 = vunpack.c.l.b16 %v637
          %v709 = vunpack.c.l.b16 %v638
          %v710 = vunpack.c.l.b16 %v639
          %v711 = vunpack.c.l.b16 %v640
          %v712 = vunpack.c.l.b16 %v641
          %v713 = vunpack.c.l.b16 %v642
          %v714 = vunpack.c.l.b16 %v643
          %v715 = vunpack.c.l.b16 %v644
          %v716 = vpack.c.b16 %v685, %v684
          %v717 = vpack.c.b16 %v687, %v686
          %v718 = vpack.c.b16 %v689, %v688
          %v719 = vpack.c.b16 %v691, %v690
          %v720 = vpack.c.b16 %v693, %v692
          %v721 = vpack.c.b16 %v695, %v694
          %v722 = vpack.c.b16 %v697, %v696
          %v723 = vpack.c.b16 %v699, %v698
          %v724 = vpack.c.b16 %v701, %v700
          %v725 = vpack.c.b16 %v703, %v702
          %v726 = vpack.c.b16 %v705, %v704
          %v727 = vpack.c.b16 %v707, %v706
          %v728 = vpack.c.b16 %v709, %v708
          %v729 = vpack.c.b16 %v711, %v710
          %v730 = vpack.c.b16 %v713, %v712
          %v731 = vpack.c.b16 %v715, %v714
          %748 = vmatprep.subr.bf16.mxu0 0
          %749 = vmatpush1.bf16.msra.mxu0 %v716
          %750 = vmatprep.subr.bf16.mxu0 0
          %751 = vmatpush1.bf16.msra.mxu0 %v717
          %752 = vmatprep.subr.bf16.mxu0 0
          %753 = vmatpush1.bf16.msra.mxu0 %v718
          %754 = vmatprep.subr.bf16.mxu0 0
          %755 = vmatpush1.bf16.msra.mxu0 %v719
          %756 = vmatprep.subr.bf16.mxu0 0
          %757 = vmatpush1.bf16.msra.mxu0 %v720
          %758 = vmatprep.subr.bf16.mxu0 0
          %759 = vmatpush1.bf16.msra.mxu0 %v721
          %760 = vmatprep.subr.bf16.mxu0 0
          %761 = vmatpush1.bf16.msra.mxu0 %v722
          %762 = vmatprep.subr.bf16.mxu0 0
          %763 = vmatpush1.bf16.msra.mxu0 %v723
          %764 = vmatprep.subr.bf16.mxu0 0
          %765 = vmatpush1.bf16.msra.mxu0 %v724
          %766 = vmatprep.subr.bf16.mxu0 0
          %767 = vmatpush1.bf16.msra.mxu0 %v725
          %768 = vmatprep.subr.bf16.mxu0 0
          %769 = vmatpush1.bf16.msra.mxu0 %v726
          %770 = vmatprep.subr.bf16.mxu0 0
          %771 = vmatpush1.bf16.msra.mxu0 %v727
          %772 = vmatprep.subr.bf16.mxu0 0
          %773 = vmatpush1.bf16.msra.mxu0 %v728
          %774 = vmatprep.subr.bf16.mxu0 0
          %775 = vmatpush1.bf16.msra.mxu0 %v729
          %776 = vmatprep.subr.bf16.mxu0 0
          %777 = vmatpush1.bf16.msra.mxu0 %v730
          %778 = vmatprep.subr.bf16.mxu0 0
          %779 = vmatpush1.bf16.msra.mxu0 %v731
          %780 = vmatprep.mubr.bf16.mxu0 %v598
          %781 = vmatmul.mubr.bf16.gmra.mrb[0].mxu0 %v597
          %v782 = vpop.f32.mrb[0].mxu0
          %v783 = vadd.f32 %v650, %v782
          %v784 = vpop.f32.mrb[0].mxu0
          %v785 = vpop.f32.mrb[0].mxu0
          %v786 = vadd.f32 %v650, %v785
          %v787 = vpop.f32.mrb[0].mxu0
          %788 = vmatprep.mubr.bf16.mxu0 %v600
          %789 = vmatmul.mubr.bf16.gmra.mrb[0].mxu0 %v599
          %v790 = vpop.f32.mrb[0].mxu0
          %v791 = vadd.f32 %v650, %v790
          %v792 = vpop.f32.mrb[0].mxu0
          %v793 = vpop.f32.mrb[0].mxu0
          %v794 = vadd.f32 %v650, %v793
          %v795 = vpop.f32.mrb[0].mxu0
          %796 = vmatprep.mubr.bf16.mxu0 %v602
          %797 = vmatmul.mubr.bf16.gmra.mrb[0].mxu0 %v601
          %v798 = vpop.f32.mrb[0].mxu0
          %v799 = vadd.f32 %v650, %v798
          %v800 = vpop.f32.mrb[0].mxu0
          %v801 = vpop.f32.mrb[0].mxu0
          %v802 = vadd.f32 %v650, %v801
          %v803 = vpop.f32.mrb[0].mxu0
          %804 = vmatprep.mubr.bf16.mxu0 %v604
          %805 = vmatmul.mubr.bf16.gmra.mrb[0].mxu0 %v603
          %v806 = vpop.f32.mrb[0].mxu0
          %v807 = vadd.f32 %v650, %v806
          %v808 = vpop.f32.mrb[0].mxu0
          %v809 = vpop.f32.mrb[0].mxu0
          %v810 = vadd.f32 %v650, %v809
          %v811 = vpop.f32.mrb[0].mxu0
          %812 = vmatprep.mubr.bf16.mxu0 %v606
          %813 = vmatmul.mubr.bf16.gmra.mrb[0].mxu0 %v605
          %v814 = vpop.f32.mrb[0].mxu0
          %v815 = vadd.f32 %v650, %v814
          %v816 = vpop.f32.mrb[0].mxu0
          %v817 = vpop.f32.mrb[0].mxu0
          %v818 = vadd.f32 %v650, %v817
          %v819 = vpop.f32.mrb[0].mxu0
          %820 = vmatprep.mubr.bf16.mxu0 %v608
          %821 = vmatmul.mubr.bf16.gmra.mrb[0].mxu0 %v607
          %v822 = vpop.f32.mrb[0].mxu0
          %v823 = vadd.f32 %v650, %v822
          %v824 = vpop.f32.mrb[0].mxu0
          %v825 = vpop.f32.mrb[0].mxu0
          %v826 = vadd.f32 %v650, %v825
          %v827 = vpop.f32.mrb[0].mxu0
          %828 = vmatprep.mubr.bf16.mxu0 %v610
          %829 = vmatmul.mubr.bf16.gmra.mrb[0].mxu0 %v609
          %v830 = vpop.f32.mrb[0].mxu0
          %v831 = vadd.f32 %v650, %v830
          %v832 = vpop.f32.mrb[0].mxu0
          %v833 = vpop.f32.mrb[0].mxu0
          %v834 = vadd.f32 %v650, %v833
          %v835 = vpop.f32.mrb[0].mxu0
          %836 = vmatprep.mubr.bf16.mxu0 %v612
          %837 = vmatmul.mubr.bf16.gmra.mrb[0].mxu0 %v611
          %v838 = vpop.f32.mrb[0].mxu0
          %v839 = vadd.f32 %v650, %v838
          %v840 = vpop.f32.mrb[0].mxu0
          %v841 = vpop.f32.mrb[0].mxu0
          %v842 = vadd.f32 %v650, %v841
          %v843 = vpop.f32.mrb[0].mxu0
          %844 = vdwg.mxu0
          %v845 = vmax.f32 %v783, 0.0
          %v846 = vmax.f32 %v786, 0.0
          %v847 = vmax.f32 %v791, 0.0
          %v848 = vmax.f32 %v794, 0.0
          %v849 = vmax.f32 %v799, 0.0
          %v850 = vmax.f32 %v802, 0.0
          %v851 = vmax.f32 %v807, 0.0
          %v852 = vmax.f32 %v810, 0.0
          %v853 = vmax.f32 %v815, 0.0
          %v854 = vmax.f32 %v818, 0.0
          %v855 = vmax.f32 %v823, 0.0
          %v856 = vmax.f32 %v826, 0.0
          %v857 = vmax.f32 %v831, 0.0
          %v858 = vmax.f32 %v834, 0.0
          %v859 = vmax.f32 %v839, 0.0
          %v860 = vmax.f32 %v842, 0.0
          %v861 = vpack.c.bf16 %v846, %v845
          %v862 = vpack.c.bf16 %v848, %v847
          %v863 = vpack.c.bf16 %v850, %v849
          %v864 = vpack.c.bf16 %v852, %v851
          %v865 = vpack.c.bf16 %v854, %v853
          %v866 = vpack.c.bf16 %v856, %v855
          %v867 = vpack.c.bf16 %v858, %v857
          %v868 = vpack.c.bf16 %v860, %v859
          %v869 = vld [vmem:[%s4] sm:$0xf]
          %v870 = vld [vmem:[%s4 + $0x4] sm:$0xf]
          %v871 = vld [vmem:[%s4 + $0x8] sm:$0xf]
          %v872 = vld [vmem:[%s4 + $0xc] sm:$0xf]
          %v873 = vld [vmem:[%s4 + $0x10] sm:$0xf]
          %v874 = vld [vmem:[%s4 + $0x14] sm:$0xf]
          %v875 = vld [vmem:[%s4 + $0x18] sm:$0xf]
          %v876 = vld [vmem:[%s4 + $0x1c] sm:$0xf]
          %v877 = vld [vmem:[%s5] sm:$0x1]
          %v879 = vlaneseq
          %v880 = vshrl.u32 %v879, 7
          %v881 = vsub.s32 0, %v880
          %v882 = vrot.slane %v877, %v881
          %v892 = vunpack.c.l.b16 %v869
          %v893 = vunpack.c.l.b16 %v870
          %v894 = vunpack.c.l.b16 %v871
          %v895 = vunpack.c.l.b16 %v872
          %v896 = vunpack.c.l.b16 %v873
          %v897 = vunpack.c.l.b16 %v874
          %v898 = vunpack.c.l.b16 %v875
          %v899 = vunpack.c.l.b16 %v876
          %v900 = vpack.c.b16 %v893, %v892
          %v901 = vpack.c.b16 %v895, %v894
          %v902 = vpack.c.b16 %v897, %v896
          %v903 = vpack.c.b16 %v899, %v898
          %vm908 = vcmask 523264
          %v910 = vsel %vm908, %v861, 0
          %v913 = vsel %vm908, %v862, 0
          %v916 = vsel %vm908, %v863, 0
          %v919 = vsel %vm908, %v864, 0
          %v922 = vsel %vm908, %v865, 0
          %v925 = vsel %vm908, %v866, 0
          %v928 = vsel %vm908, %v867, 0
          %v931 = vsel %vm908, %v868, 0
          %933 = vmatprep.subr.bf16.mxu0 0
          %934 = vmatpush1.bf16.msra.mxu0 %v900
          %935 = vmatprep.subr.bf16.mxu0 0
          %936 = vmatpush1.bf16.msra.mxu0 %v901
          %937 = vmatprep.subr.bf16.mxu0 0
          %938 = vmatpush1.bf16.msra.mxu0 %v902
          %939 = vmatprep.subr.bf16.mxu0 0
          %940 = vmatpush1.bf16.msra.mxu0 %v903
          %941 = vmatprep.subr.bf16.mxu0 0
          %942 = vmatpush1.bf16.msra.mxu0 0
          %943 = vmatprep.subr.bf16.mxu0 0
          %944 = vmatpush1.bf16.msra.mxu0 0
          %945 = vmatprep.subr.bf16.mxu0 0
          %946 = vmatpush1.bf16.msra.mxu0 0
          %947 = vmatprep.subr.bf16.mxu0 0
          %948 = vmatpush1.bf16.msra.mxu0 0
          %949 = vmatprep.subr.bf16.mxu0 0
          %950 = vmatpush1.bf16.msra.mxu0 0
          %951 = vmatprep.subr.bf16.mxu0 0
          %952 = vmatpush1.bf16.msra.mxu0 0
          %953 = vmatprep.subr.bf16.mxu0 0
          %954 = vmatpush1.bf16.msra.mxu0 0
          %955 = vmatprep.subr.bf16.mxu0 0
          %956 = vmatpush1.bf16.msra.mxu0 0
          %957 = vmatprep.subr.bf16.mxu0 0
          %958 = vmatpush1.bf16.msra.mxu0 0
          %959 = vmatprep.subr.bf16.mxu0 0
          %960 = vmatpush1.bf16.msra.mxu0 0
          %961 = vmatprep.subr.bf16.mxu0 0
          %962 = vmatpush1.bf16.msra.mxu0 0
          %963 = vmatprep.subr.bf16.mxu0 0
          %964 = vmatpush1.bf16.msra.mxu0 0
          %965 = vmatprep.mubr.bf16.mxu0 0
          %966 = vmatmul.mubr.bf16.gmra.mrb[0].mxu0 %v910
          %v967 = vpop.f32.mrb[0].mxu0
          %v968 = vadd.f32 %v882, %v967
          %v969 = vpop.f32.mrb[0].mxu0
          %v970 = vpop.f32.mrb[0].mxu0
          %v971 = vadd.f32 %v882, %v970
          %v972 = vpop.f32.mrb[0].mxu0
          %973 = vmatprep.mubr.bf16.mxu0 0
          %974 = vmatmul.mubr.bf16.gmra.mrb[0].mxu0 %v913
          %v975 = vpop.f32.mrb[0].mxu0
          %v976 = vadd.f32 %v882, %v975
          %v977 = vpop.f32.mrb[0].mxu0
          %v978 = vpop.f32.mrb[0].mxu0
          %v979 = vadd.f32 %v882, %v978
          %v980 = vpop.f32.mrb[0].mxu0
          %981 = vmatprep.mubr.bf16.mxu0 0
          %982 = vmatmul.mubr.bf16.gmra.mrb[0].mxu0 %v916
          %v983 = vpop.f32.mrb[0].mxu0
          %v984 = vadd.f32 %v882, %v983
          %v985 = vpop.f32.mrb[0].mxu0
          %v986 = vpop.f32.mrb[0].mxu0
          %v987 = vadd.f32 %v882, %v986
          %v988 = vpop.f32.mrb[0].mxu0
          %989 = vmatprep.mubr.bf16.mxu0 0
          %990 = vmatmul.mubr.bf16.gmra.mrb[0].mxu0 %v919
          %v991 = vpop.f32.mrb[0].mxu0
          %v992 = vadd.f32 %v882, %v991
          %v993 = vpop.f32.mrb[0].mxu0
          %v994 = vpop.f32.mrb[0].mxu0
          %v995 = vadd.f32 %v882, %v994
          %v996 = vpop.f32.mrb[0].mxu0
          %997 = vmatprep.mubr.bf16.mxu0 0
          %998 = vmatmul.mubr.bf16.gmra.mrb[0].mxu0 %v922
          %v999 = vpop.f32.mrb[0].mxu0
          %v1000 = vadd.f32 %v882, %v999
          %v1001 = vpop.f32.mrb[0].mxu0
          %v1002 = vpop.f32.mrb[0].mxu0
          %v1003 = vadd.f32 %v882, %v1002
          %v1004 = vpop.f32.mrb[0].mxu0
          %1005 = vmatprep.mubr.bf16.mxu0 0
          %1006 = vmatmul.mubr.bf16.gmra.mrb[0].mxu0 %v925
          %v1007 = vpop.f32.mrb[0].mxu0
          %v1008 = vadd.f32 %v882, %v1007
          %v1009 = vpop.f32.mrb[0].mxu0
          %v1010 = vpop.f32.mrb[0].mxu0
          %v1011 = vadd.f32 %v882, %v1010
          %v1012 = vpop.f32.mrb[0].mxu0
          %1013 = vmatprep.mubr.bf16.mxu0 0
          %1014 = vmatmul.mubr.bf16.gmra.mrb[0].mxu0 %v928
          %v1015 = vpop.f32.mrb[0].mxu0
          %v1016 = vadd.f32 %v882, %v1015
          %v1017 = vpop.f32.mrb[0].mxu0
          %v1018 = vpop.f32.mrb[0].mxu0
          %v1019 = vadd.f32 %v882, %v1018
          %v1020 = vpop.f32.mrb[0].mxu0
          %1021 = vmatprep.mubr.bf16.mxu0 0
          %1022 = vmatmul.mubr.bf16.gmra.mrb[0].mxu0 %v931
          %v1023 = vpop.f32.mrb[0].mxu0
          %v1024 = vadd.f32 %v882, %v1023
          %v1025 = vpop.f32.mrb[0].mxu0
          %v1026 = vpop.f32.mrb[0].mxu0
          %v1027 = vadd.f32 %v882, %v1026
          %v1028 = vpop.f32.mrb[0].mxu0
          %1029 = vdwg.mxu0
          %v1030 = vmax.f32 %v968, 0.0
          %v1031 = vmax.f32 %v971, 0.0
          %v1032 = vmax.f32 %v976, 0.0
          %v1033 = vmax.f32 %v979, 0.0
          %v1034 = vmax.f32 %v984, 0.0
          %v1035 = vmax.f32 %v987, 0.0
          %v1036 = vmax.f32 %v992, 0.0
          %v1037 = vmax.f32 %v995, 0.0
          %v1038 = vmax.f32 %v1000, 0.0
          %v1039 = vmax.f32 %v1003, 0.0
          %v1040 = vmax.f32 %v1008, 0.0
          %v1041 = vmax.f32 %v1011, 0.0
          %v1042 = vmax.f32 %v1016, 0.0
          %v1043 = vmax.f32 %v1019, 0.0
          %v1044 = vmax.f32 %v1024, 0.0
          %v1045 = vmax.f32 %v1027, 0.0
          %v1046 = vpack.c.bf16 %v1031, %v1030
          %v1047 = vpack.c.bf16 %v1033, %v1032
          %v1048 = vpack.c.bf16 %v1035, %v1034
          %v1049 = vpack.c.bf16 %v1037, %v1036
          %v1050 = vpack.c.bf16 %v1039, %v1038
          %v1051 = vpack.c.bf16 %v1041, %v1040
          %v1052 = vpack.c.bf16 %v1043, %v1042
          %v1053 = vpack.c.bf16 %v1045, %v1044
          %v1054 = vld [vmem:[%s6] sm:$0xf]
          %v1055 = vld [vmem:[%s6 + $0x4] sm:$0xf]
          %v1056 = vld [vmem:[%s6 + $0x8] sm:$0xf]
          %v1057 = vld [vmem:[%s6 + $0xc] sm:$0xf]
          %v1058 = vld [vmem:[%s7] sm:$0x1]
          %v1060 = vlaneseq
          %v1061 = vshrl.u32 %v1060, 7
          %v1062 = vsub.s32 0, %v1061
          %v1063 = vrot.slane %v1058, %v1062
          %v1069 = vunpack.c.l.b16 %v1054
          %v1070 = vunpack.c.l.b16 %v1055
          %v1071 = vunpack.c.l.b16 %v1056
          %v1072 = vunpack.c.l.b16 %v1057
          %v1073 = vpack.c.b16 %v1070, %v1069
          %v1074 = vpack.c.b16 %v1072, %v1071
          %vm1077 = vcmask 261120
          %v1079 = vsel %vm1077, %v1046, 0
          %v1082 = vsel %vm1077, %v1047, 0
          %v1085 = vsel %vm1077, %v1048, 0
          %v1088 = vsel %vm1077, %v1049, 0
          %v1091 = vsel %vm1077, %v1050, 0
          %v1094 = vsel %vm1077, %v1051, 0
          %v1097 = vsel %vm1077, %v1052, 0
          %v1100 = vsel %vm1077, %v1053, 0
          %1102 = vmatprep.subr.bf16.mxu0 0
          %1103 = vmatpush1.bf16.msra.mxu0 %v1073
          %1104 = vmatprep.subr.bf16.mxu0 0
          %1105 = vmatpush1.bf16.msra.mxu0 %v1074
          %1106 = vmatprep.subr.bf16.mxu0 0
          %1107 = vmatpush1.bf16.msra.mxu0 0
          %1108 = vmatprep.subr.bf16.mxu0 0
          %1109 = vmatpush1.bf16.msra.mxu0 0
          %1110 = vmatprep.subr.bf16.mxu0 0
          %1111 = vmatpush1.bf16.msra.mxu0 0
          %1112 = vmatprep.subr.bf16.mxu0 0
          %1113 = vmatpush1.bf16.msra.mxu0 0
          %1114 = vmatprep.subr.bf16.mxu0 0
          %1115 = vmatpush1.bf16.msra.mxu0 0
          %1116 = vmatprep.subr.bf16.mxu0 0
          %1117 = vmatpush1.bf16.msra.mxu0 0
          %1118 = vmatprep.subr.bf16.mxu0 0
          %1119 = vmatpush1.bf16.msra.mxu0 0
          %1120 = vmatprep.subr.bf16.mxu0 0
          %1121 = vmatpush1.bf16.msra.mxu0 0
          %1122 = vmatprep.subr.bf16.mxu0 0
          %1123 = vmatpush1.bf16.msra.mxu0 0
          %1124 = vmatprep.subr.bf16.mxu0 0
          %1125 = vmatpush1.bf16.msra.mxu0 0
          %1126 = vmatprep.subr.bf16.mxu0 0
          %1127 = vmatpush1.bf16.msra.mxu0 0
          %1128 = vmatprep.subr.bf16.mxu0 0
          %1129 = vmatpush1.bf16.msra.mxu0 0
          %1130 = vmatprep.subr.bf16.mxu0 0
          %1131 = vmatpush1.bf16.msra.mxu0 0
          %1132 = vmatprep.subr.bf16.mxu0 0
          %1133 = vmatpush1.bf16.msra.mxu0 0
          %1134 = vmatprep.mubr.bf16.mxu0 0
          %1135 = vmatmul.mubr.bf16.gmra.mrb[0].mxu0 %v1079
          %v1136 = vpop.f32.mrb[0].mxu0
          %v1137 = vadd.f32 %v1063, %v1136
          %v1138 = vpop.f32.mrb[0].mxu0
          %v1139 = vpop.f32.mrb[0].mxu0
          %v1140 = vadd.f32 %v1063, %v1139
          %v1141 = vpop.f32.mrb[0].mxu0
          %1142 = vmatprep.mubr.bf16.mxu0 0
          %1143 = vmatmul.mubr.bf16.gmra.mrb[0].mxu0 %v1082
          %v1144 = vpop.f32.mrb[0].mxu0
          %v1145 = vadd.f32 %v1063, %v1144
          %v1146 = vpop.f32.mrb[0].mxu0
          %v1147 = vpop.f32.mrb[0].mxu0
          %v1148 = vadd.f32 %v1063, %v1147
          %v1149 = vpop.f32.mrb[0].mxu0
          %1150 = vmatprep.mubr.bf16.mxu0 0
          %1151 = vmatmul.mubr.bf16.gmra.mrb[0].mxu0 %v1085
          %v1152 = vpop.f32.mrb[0].mxu0
          %v1153 = vadd.f32 %v1063, %v1152
          %v1154 = vpop.f32.mrb[0].mxu0
          %v1155 = vpop.f32.mrb[0].mxu0
          %v1156 = vadd.f32 %v1063, %v1155
          %v1157 = vpop.f32.mrb[0].mxu0
          %1158 = vmatprep.mubr.bf16.mxu0 0
          %1159 = vmatmul.mubr.bf16.gmra.mrb[0].mxu0 %v1088
          %v1160 = vpop.f32.mrb[0].mxu0
          %v1161 = vadd.f32 %v1063, %v1160
          %v1162 = vpop.f32.mrb[0].mxu0
          %v1163 = vpop.f32.mrb[0].mxu0
          %v1164 = vadd.f32 %v1063, %v1163
          %v1165 = vpop.f32.mrb[0].mxu0
          %1166 = vmatprep.mubr.bf16.mxu0 0
          %1167 = vmatmul.mubr.bf16.gmra.mrb[0].mxu0 %v1091
          %v1168 = vpop.f32.mrb[0].mxu0
          %v1169 = vadd.f32 %v1063, %v1168
          %v1170 = vpop.f32.mrb[0].mxu0
          %v1171 = vpop.f32.mrb[0].mxu0
          %v1172 = vadd.f32 %v1063, %v1171
          %v1173 = vpop.f32.mrb[0].mxu0
          %1174 = vmatprep.mubr.bf16.mxu0 0
          %1175 = vmatmul.mubr.bf16.gmra.mrb[0].mxu0 %v1094
          %v1176 = vpop.f32.mrb[0].mxu0
          %v1177 = vadd.f32 %v1063, %v1176
          %v1178 = vpop.f32.mrb[0].mxu0
          %v1179 = vpop.f32.mrb[0].mxu0
          %v1180 = vadd.f32 %v1063, %v1179
          %v1181 = vpop.f32.mrb[0].mxu0
          %1182 = vmatprep.mubr.bf16.mxu0 0
          %1183 = vmatmul.mubr.bf16.gmra.mrb[0].mxu0 %v1097
          %v1184 = vpop.f32.mrb[0].mxu0
          %v1185 = vadd.f32 %v1063, %v1184
          %v1186 = vpop.f32.mrb[0].mxu0
          %v1187 = vpop.f32.mrb[0].mxu0
          %v1188 = vadd.f32 %v1063, %v1187
          %v1189 = vpop.f32.mrb[0].mxu0
          %1190 = vmatprep.mubr.bf16.mxu0 0
          %1191 = vmatmul.mubr.bf16.gmra.mrb[0].mxu0 %v1100
          %v1192 = vpop.f32.mrb[0].mxu0
          %v1193 = vadd.f32 %v1063, %v1192
          %v1194 = vpop.f32.mrb[0].mxu0
          %v1195 = vpop.f32.mrb[0].mxu0
          %v1196 = vadd.f32 %v1063, %v1195
          %v1197 = vpop.f32.mrb[0].mxu0
          %1198 = vdwg.mxu0
          %v1199 = vmax.f32 %v1137, 0.0
          %v1200 = vmax.f32 %v1140, 0.0
          %v1201 = vmax.f32 %v1145, 0.0
          %v1202 = vmax.f32 %v1148, 0.0
          %v1203 = vmax.f32 %v1153, 0.0
          %v1204 = vmax.f32 %v1156, 0.0
          %v1205 = vmax.f32 %v1161, 0.0
          %v1206 = vmax.f32 %v1164, 0.0
          %v1207 = vmax.f32 %v1169, 0.0
          %v1208 = vmax.f32 %v1172, 0.0
          %v1209 = vmax.f32 %v1177, 0.0
          %v1210 = vmax.f32 %v1180, 0.0
          %v1211 = vmax.f32 %v1185, 0.0
          %v1212 = vmax.f32 %v1188, 0.0
          %v1213 = vmax.f32 %v1193, 0.0
          %v1214 = vmax.f32 %v1196, 0.0
          %v1215 = vpack.c.bf16 %v1200, %v1199
          %v1216 = vpack.c.bf16 %v1202, %v1201
          %v1217 = vpack.c.bf16 %v1204, %v1203
          %v1218 = vpack.c.bf16 %v1206, %v1205
          %v1219 = vpack.c.bf16 %v1208, %v1207
          %v1220 = vpack.c.bf16 %v1210, %v1209
          %v1221 = vpack.c.bf16 %v1212, %v1211
          %v1222 = vpack.c.bf16 %v1214, %v1213
          %v1223 = vld [vmem:[%s8] sm:$0xf]
          %v1224 = vld [vmem:[%s8 + $0x4] sm:$0xf]
          %v1225 = vld [vmem:[%s9] sm:$0x1]
          %v1227 = vlaneseq
          %v1228 = vshrl.u32 %v1227, 7
          %v1229 = vsub.s32 0, %v1228
          %v1230 = vrot.slane %v1225, %v1229
          %v1234 = vunpack.c.l.b16 %v1223
          %v1235 = vunpack.c.l.b16 %v1224
          %v1236 = vpack.c.b16 %v1235, %v1234
          %vm1238 = vcmask 130048
          %v1240 = vsel %vm1238, %v1215, 0
          %v1243 = vsel %vm1238, %v1216, 0
          %v1246 = vsel %vm1238, %v1217, 0
          %v1249 = vsel %vm1238, %v1218, 0
          %v1252 = vsel %vm1238, %v1219, 0
          %v1255 = vsel %vm1238, %v1220, 0
          %v1258 = vsel %vm1238, %v1221, 0
          %v1261 = vsel %vm1238, %v1222, 0
          %1263 = vmatprep.subr.bf16.mxu0 0
          %1264 = vmatpush1.bf16.msra.mxu0 %v1236
          %1265 = vmatprep.subr.bf16.mxu0 0
          %1266 = vmatpush1.bf16.msra.mxu0 0
          %1267 = vmatprep.subr.bf16.mxu0 0
          %1268 = vmatpush1.bf16.msra.mxu0 0
          %1269 = vmatprep.subr.bf16.mxu0 0
          %1270 = vmatpush1.bf16.msra.mxu0 0
          %1271 = vmatprep.subr.bf16.mxu0 0
          %1272 = vmatpush1.bf16.msra.mxu0 0
          %1273 = vmatprep.subr.bf16.mxu0 0
          %1274 = vmatpush1.bf16.msra.mxu0 0
          %1275 = vmatprep.subr.bf16.mxu0 0
          %1276 = vmatpush1.bf16.msra.mxu0 0
          %1277 = vmatprep.subr.bf16.mxu0 0
          %1278 = vmatpush1.bf16.msra.mxu0 0
          %1279 = vmatprep.subr.bf16.mxu0 0
          %1280 = vmatpush1.bf16.msra.mxu0 0
          %1281 = vmatprep.subr.bf16.mxu0 0
          %1282 = vmatpush1.bf16.msra.mxu0 0
          %1283 = vmatprep.subr.bf16.mxu0 0
          %1284 = vmatpush1.bf16.msra.mxu0 0
          %1285 = vmatprep.subr.bf16.mxu0 0
          %1286 = vmatpush1.bf16.msra.mxu0 0
          %1287 = vmatprep.subr.bf16.mxu0 0
          %1288 = vmatpush1.bf16.msra.mxu0 0
          %1289 = vmatprep.subr.bf16.mxu0 0
          %1290 = vmatpush1.bf16.msra.mxu0 0
          %1291 = vmatprep.subr.bf16.mxu0 0
          %1292 = vmatpush1.bf16.msra.mxu0 0
          %1293 = vmatprep.subr.bf16.mxu0 0
          %1294 = vmatpush1.bf16.msra.mxu0 0
          %1295 = vmatprep.mubr.bf16.mxu0 0
          %1296 = vmatmul.mubr.bf16.gmra.mrb[0].mxu0 %v1240
          %v1297 = vpop.f32.mrb[0].mxu0
          %v1298 = vadd.f32 %v1230, %v1297
          %v1299 = vpop.f32.mrb[0].mxu0
          %v1300 = vpop.f32.mrb[0].mxu0
          %v1301 = vadd.f32 %v1230, %v1300
          %v1302 = vpop.f32.mrb[0].mxu0
          %1303 = vmatprep.mubr.bf16.mxu0 0
          %1304 = vmatmul.mubr.bf16.gmra.mrb[0].mxu0 %v1243
          %v1305 = vpop.f32.mrb[0].mxu0
          %v1306 = vadd.f32 %v1230, %v1305
          %v1307 = vpop.f32.mrb[0].mxu0
          %v1308 = vpop.f32.mrb[0].mxu0
          %v1309 = vadd.f32 %v1230, %v1308
          %v1310 = vpop.f32.mrb[0].mxu0
          %1311 = vmatprep.mubr.bf16.mxu0 0
          %1312 = vmatmul.mubr.bf16.gmra.mrb[0].mxu0 %v1246
          %v1313 = vpop.f32.mrb[0].mxu0
          %v1314 = vadd.f32 %v1230, %v1313
          %v1315 = vpop.f32.mrb[0].mxu0
          %v1316 = vpop.f32.mrb[0].mxu0
          %v1317 = vadd.f32 %v1230, %v1316
          %v1318 = vpop.f32.mrb[0].mxu0
          %1319 = vmatprep.mubr.bf16.mxu0 0
          %1320 = vmatmul.mubr.bf16.gmra.mrb[0].mxu0 %v1249
          %v1321 = vpop.f32.mrb[0].mxu0
          %v1322 = vadd.f32 %v1230, %v1321
          %v1323 = vpop.f32.mrb[0].mxu0
          %v1324 = vpop.f32.mrb[0].mxu0
          %v1325 = vadd.f32 %v1230, %v1324
          %v1326 = vpop.f32.mrb[0].mxu0
          %1327 = vmatprep.mubr.bf16.mxu0 0
          %1328 = vmatmul.mubr.bf16.gmra.mrb[0].mxu0 %v1252
          %v1329 = vpop.f32.mrb[0].mxu0
          %v1330 = vadd.f32 %v1230, %v1329
          %v1331 = vpop.f32.mrb[0].mxu0
          %v1332 = vpop.f32.mrb[0].mxu0
          %v1333 = vadd.f32 %v1230, %v1332
          %v1334 = vpop.f32.mrb[0].mxu0
          %1335 = vmatprep.mubr.bf16.mxu0 0
          %1336 = vmatmul.mubr.bf16.gmra.mrb[0].mxu0 %v1255
          %v1337 = vpop.f32.mrb[0].mxu0
          %v1338 = vadd.f32 %v1230, %v1337
          %v1339 = vpop.f32.mrb[0].mxu0
          %v1340 = vpop.f32.mrb[0].mxu0
          %v1341 = vadd.f32 %v1230, %v1340
          %v1342 = vpop.f32.mrb[0].mxu0
          %1343 = vmatprep.mubr.bf16.mxu0 0
          %1344 = vmatmul.mubr.bf16.gmra.mrb[0].mxu0 %v1258
          %v1345 = vpop.f32.mrb[0].mxu0
          %v1346 = vadd.f32 %v1230, %v1345
          %v1347 = vpop.f32.mrb[0].mxu0
          %v1348 = vpop.f32.mrb[0].mxu0
          %v1349 = vadd.f32 %v1230, %v1348
          %v1350 = vpop.f32.mrb[0].mxu0
          %1351 = vmatprep.mubr.bf16.mxu0 0
          %1352 = vmatmul.mubr.bf16.gmra.mrb[0].mxu0 %v1261
          %v1353 = vpop.f32.mrb[0].mxu0
          %v1354 = vadd.f32 %v1230, %v1353
          %v1355 = vpop.f32.mrb[0].mxu0
          %v1356 = vpop.f32.mrb[0].mxu0
          %v1357 = vadd.f32 %v1230, %v1356
          %v1358 = vpop.f32.mrb[0].mxu0
          %1359 = vdwg.mxu0
          %v1360 = vmax.f32 %v1298, 0.0
          %v1361 = vmax.f32 %v1301, 0.0
          %v1362 = vmax.f32 %v1306, 0.0
          %v1363 = vmax.f32 %v1309, 0.0
          %v1364 = vmax.f32 %v1314, 0.0
          %v1365 = vmax.f32 %v1317, 0.0
          %v1366 = vmax.f32 %v1322, 0.0
          %v1367 = vmax.f32 %v1325, 0.0
          %v1368 = vmax.f32 %v1330, 0.0
          %v1369 = vmax.f32 %v1333, 0.0
          %v1370 = vmax.f32 %v1338, 0.0
          %v1371 = vmax.f32 %v1341, 0.0
          %v1372 = vmax.f32 %v1346, 0.0
          %v1373 = vmax.f32 %v1349, 0.0
          %v1374 = vmax.f32 %v1354, 0.0
          %v1375 = vmax.f32 %v1357, 0.0
          %v1376 = vpack.c.bf16 %v1361, %v1360
          %v1377 = vpack.c.bf16 %v1363, %v1362
          %v1378 = vpack.c.bf16 %v1365, %v1364
          %v1379 = vpack.c.bf16 %v1367, %v1366
          %v1380 = vpack.c.bf16 %v1369, %v1368
          %v1381 = vpack.c.bf16 %v1371, %v1370
          %v1382 = vpack.c.bf16 %v1373, %v1372
          %v1383 = vpack.c.bf16 %v1375, %v1374
          %v1384 = vld [vmem:[%s10] sm:$0xf]
          %v1385 = vld [vmem:[%s10 + $0x4] sm:$0xf]
          %v1386 = vld [vmem:[%s10 + $0x8] sm:$0xf]
          %v1387 = vld [vmem:[%s10 + $0xc] sm:$0xf]
          %v1388 = vld [vmem:[%s11] sm:$0x1]
          %v1390 = vlaneseq
          %v1391 = vshrl.u32 %v1390, 7
          %v1392 = vsub.s32 0, %v1391
          %v1393 = vrot.slane %v1388, %v1392
          %v1399 = vunpack.c.l.b16 %v1384
          %v1400 = vunpack.c.l.b16 %v1385
          %v1401 = vunpack.c.l.b16 %v1386
          %v1402 = vunpack.c.l.b16 %v1387
          %v1403 = vpack.c.b16 %v1400, %v1399
          %v1404 = vpack.c.b16 %v1402, %v1401
          %v1408 = vsel %vm1077, %v1376, 0
          %v1411 = vsel %vm1077, %v1377, 0
          %v1414 = vsel %vm1077, %v1378, 0
          %v1417 = vsel %vm1077, %v1379, 0
          %v1420 = vsel %vm1077, %v1380, 0
          %v1423 = vsel %vm1077, %v1381, 0
          %v1426 = vsel %vm1077, %v1382, 0
          %v1429 = vsel %vm1077, %v1383, 0
          %1431 = vmatprep.subr.bf16.mxu0 0
          %1432 = vmatpush1.bf16.msra.mxu0 %v1403
          %1433 = vmatprep.subr.bf16.mxu0 0
          %1434 = vmatpush1.bf16.msra.mxu0 %v1404
          %1435 = vmatprep.subr.bf16.mxu0 0
          %1436 = vmatpush1.bf16.msra.mxu0 0
          %1437 = vmatprep.subr.bf16.mxu0 0
          %1438 = vmatpush1.bf16.msra.mxu0 0
          %1439 = vmatprep.subr.bf16.mxu0 0
          %1440 = vmatpush1.bf16.msra.mxu0 0
          %1441 = vmatprep.subr.bf16.mxu0 0
          %1442 = vmatpush1.bf16.msra.mxu0 0
          %1443 = vmatprep.subr.bf16.mxu0 0
          %1444 = vmatpush1.bf16.msra.mxu0 0
          %1445 = vmatprep.subr.bf16.mxu0 0
          %1446 = vmatpush1.bf16.msra.mxu0 0
          %1447 = vmatprep.subr.bf16.mxu0 0
          %1448 = vmatpush1.bf16.msra.mxu0 0
          %1449 = vmatprep.subr.bf16.mxu0 0
          %1450 = vmatpush1.bf16.msra.mxu0 0
          %1451 = vmatprep.subr.bf16.mxu0 0
          %1452 = vmatpush1.bf16.msra.mxu0 0
          %1453 = vmatprep.subr.bf16.mxu0 0
          %1454 = vmatpush1.bf16.msra.mxu0 0
          %1455 = vmatprep.subr.bf16.mxu0 0
          %1456 = vmatpush1.bf16.msra.mxu0 0
          %1457 = vmatprep.subr.bf16.mxu0 0
          %1458 = vmatpush1.bf16.msra.mxu0 0
          %1459 = vmatprep.subr.bf16.mxu0 0
          %1460 = vmatpush1.bf16.msra.mxu0 0
          %1461 = vmatprep.subr.bf16.mxu0 0
          %1462 = vmatpush1.bf16.msra.mxu0 0
          %1463 = vmatprep.mubr.bf16.mxu0 0
          %1464 = vmatmul.mubr.bf16.gmra.mrb[0].mxu0 %v1408
          %v1465 = vpop.f32.mrb[0].mxu0
          %v1466 = vadd.f32 %v1393, %v1465
          %v1467 = vpop.f32.mrb[0].mxu0
          %v1468 = vpop.f32.mrb[0].mxu0
          %v1469 = vadd.f32 %v1393, %v1468
          %v1470 = vpop.f32.mrb[0].mxu0
          %1471 = vmatprep.mubr.bf16.mxu0 0
          %1472 = vmatmul.mubr.bf16.gmra.mrb[0].mxu0 %v1411
          %v1473 = vpop.f32.mrb[0].mxu0
          %v1474 = vadd.f32 %v1393, %v1473
          %v1475 = vpop.f32.mrb[0].mxu0
          %v1476 = vpop.f32.mrb[0].mxu0
          %v1477 = vadd.f32 %v1393, %v1476
          %v1478 = vpop.f32.mrb[0].mxu0
          %1479 = vmatprep.mubr.bf16.mxu0 0
          %1480 = vmatmul.mubr.bf16.gmra.mrb[0].mxu0 %v1414
          %v1481 = vpop.f32.mrb[0].mxu0
          %v1482 = vadd.f32 %v1393, %v1481
          %v1483 = vpop.f32.mrb[0].mxu0
          %v1484 = vpop.f32.mrb[0].mxu0
          %v1485 = vadd.f32 %v1393, %v1484
          %v1486 = vpop.f32.mrb[0].mxu0
          %1487 = vmatprep.mubr.bf16.mxu0 0
          %1488 = vmatmul.mubr.bf16.gmra.mrb[0].mxu0 %v1417
          %v1489 = vpop.f32.mrb[0].mxu0
          %v1490 = vadd.f32 %v1393, %v1489
          %v1491 = vpop.f32.mrb[0].mxu0
          %v1492 = vpop.f32.mrb[0].mxu0
          %v1493 = vadd.f32 %v1393, %v1492
          %v1494 = vpop.f32.mrb[0].mxu0
          %1495 = vmatprep.mubr.bf16.mxu0 0
          %1496 = vmatmul.mubr.bf16.gmra.mrb[0].mxu0 %v1420
          %v1497 = vpop.f32.mrb[0].mxu0
          %v1498 = vadd.f32 %v1393, %v1497
          %v1499 = vpop.f32.mrb[0].mxu0
          %v1500 = vpop.f32.mrb[0].mxu0
          %v1501 = vadd.f32 %v1393, %v1500
          %v1502 = vpop.f32.mrb[0].mxu0
          %1503 = vmatprep.mubr.bf16.mxu0 0
          %1504 = vmatmul.mubr.bf16.gmra.mrb[0].mxu0 %v1423
          %v1505 = vpop.f32.mrb[0].mxu0
          %v1506 = vadd.f32 %v1393, %v1505
          %v1507 = vpop.f32.mrb[0].mxu0
          %v1508 = vpop.f32.mrb[0].mxu0
          %v1509 = vadd.f32 %v1393, %v1508
          %v1510 = vpop.f32.mrb[0].mxu0
          %1511 = vmatprep.mubr.bf16.mxu0 0
          %1512 = vmatmul.mubr.bf16.gmra.mrb[0].mxu0 %v1426
          %v1513 = vpop.f32.mrb[0].mxu0
          %v1514 = vadd.f32 %v1393, %v1513
          %v1515 = vpop.f32.mrb[0].mxu0
          %v1516 = vpop.f32.mrb[0].mxu0
          %v1517 = vadd.f32 %v1393, %v1516
          %v1518 = vpop.f32.mrb[0].mxu0
          %1519 = vmatprep.mubr.bf16.mxu0 0
          %1520 = vmatmul.mubr.bf16.gmra.mrb[0].mxu0 %v1429
          %v1521 = vpop.f32.mrb[0].mxu0
          %v1522 = vadd.f32 %v1393, %v1521
          %v1523 = vpop.f32.mrb[0].mxu0
          %v1524 = vpop.f32.mrb[0].mxu0
          %v1525 = vadd.f32 %v1393, %v1524
          %v1526 = vpop.f32.mrb[0].mxu0
          %1527 = vdwg.mxu0
          %v1528 = vmax.f32 %v1466, 0.0
          %v1529 = vmax.f32 %v1469, 0.0
          %v1530 = vmax.f32 %v1474, 0.0
          %v1531 = vmax.f32 %v1477, 0.0
          %v1532 = vmax.f32 %v1482, 0.0
          %v1533 = vmax.f32 %v1485, 0.0
          %v1534 = vmax.f32 %v1490, 0.0
          %v1535 = vmax.f32 %v1493, 0.0
          %v1536 = vmax.f32 %v1498, 0.0
          %v1537 = vmax.f32 %v1501, 0.0
          %v1538 = vmax.f32 %v1506, 0.0
          %v1539 = vmax.f32 %v1509, 0.0
          %v1540 = vmax.f32 %v1514, 0.0
          %v1541 = vmax.f32 %v1517, 0.0
          %v1542 = vmax.f32 %v1522, 0.0
          %v1543 = vmax.f32 %v1525, 0.0
          %v1544 = vpack.c.bf16 %v1529, %v1528
          %v1545 = vpack.c.bf16 %v1531, %v1530
          %v1546 = vpack.c.bf16 %v1533, %v1532
          %v1547 = vpack.c.bf16 %v1535, %v1534
          %v1548 = vpack.c.bf16 %v1537, %v1536
          %v1549 = vpack.c.bf16 %v1539, %v1538
          %v1550 = vpack.c.bf16 %v1541, %v1540
          %v1551 = vpack.c.bf16 %v1543, %v1542
          %1552 = vst.msk [vmem:[#allocation2] sm:$0xff] %vm908, %v1544
          %1553 = vst.msk [vmem:[#allocation2 + $0x8] sm:$0xff] %vm908, %v1545
          %1554 = vst.msk [vmem:[#allocation2 + $0x10] sm:$0xff] %vm908, %v1546
          %1555 = vst.msk [vmem:[#allocation2 + $0x18] sm:$0xff] %vm908, %v1547
          %1556 = vst.msk [vmem:[#allocation2 + $0x20] sm:$0xff] %vm908, %v1548
          %1557 = vst.msk [vmem:[#allocation2 + $0x28] sm:$0xff] %vm908, %v1549
          %1558 = vst.msk [vmem:[#allocation2 + $0x30] sm:$0xff] %vm908, %v1550
          %1559 = vst.msk [vmem:[#allocation2 + $0x38] sm:$0xff] %vm908, %v1551
          %1560 = vst.msk [vmem:[%s536] sm:$0xff] %vm908, %v845
          %1561 = vst.msk [vmem:[%s536 + $0x18] sm:$0xff] %vm908, %v846
          %1562 = vst.msk [vmem:[%s536 + $0x30] sm:$0xff] %vm908, %v847
          %1563 = vst.msk [vmem:[%s536 + $0x48] sm:$0xff] %vm908, %v848
          %1564 = vst.msk [vmem:[%s536 + $0x60] sm:$0xff] %vm908, %v849
          %1565 = vst.msk [vmem:[%s536 + $0x78] sm:$0xff] %vm908, %v850
          %1566 = vst.msk [vmem:[%s536 + $0x90] sm:$0xff] %vm908, %v851
          %1567 = vst.msk [vmem:[%s536 + $0xa8] sm:$0xff] %vm908, %v852
          %1568 = vst.msk [vmem:[%s536 + $0xc0] sm:$0xff] %vm908, %v853
          %1569 = vst.msk [vmem:[%s536 + $0xd8] sm:$0xff] %vm908, %v854
          %1570 = vst.msk [vmem:[%s536 + $0xf0] sm:$0xff] %vm908, %v855
          %1571 = vst.msk [vmem:[%s536 + $0x108] sm:$0xff] %vm908, %v856
          %1572 = vst.msk [vmem:[%s536 + $0x120] sm:$0xff] %vm908, %v857
          %1573 = vst.msk [vmem:[%s536 + $0x138] sm:$0xff] %vm908, %v858
          %1574 = vst.msk [vmem:[%s536 + $0x150] sm:$0xff] %vm908, %v859
          %1575 = vst.msk [vmem:[%s536 + $0x168] sm:$0xff] %vm908, %v860
          %vm1576 = vcmask 1048064
          %1577 = vst.msk [vmem:[%s536] sm:$0xff] %vm1576, 0.0
          %1578 = vst.msk [vmem:[%s536 + $0x18] sm:$0xff] %vm1576, 0.0
          %1579 = vst.msk [vmem:[%s536 + $0x30] sm:$0xff] %vm1576, 0.0
          %1580 = vst.msk [vmem:[%s536 + $0x48] sm:$0xff] %vm1576, 0.0
          %1581 = vst.msk [vmem:[%s536 + $0x60] sm:$0xff] %vm1576, 0.0
          %1582 = vst.msk [vmem:[%s536 + $0x78] sm:$0xff] %vm1576, 0.0
          %1583 = vst.msk [vmem:[%s536 + $0x90] sm:$0xff] %vm1576, 0.0
          %1584 = vst.msk [vmem:[%s536 + $0xa8] sm:$0xff] %vm1576, 0.0
          %1585 = vst.msk [vmem:[%s536 + $0xc0] sm:$0xff] %vm1576, 0.0
          %1586 = vst.msk [vmem:[%s536 + $0xd8] sm:$0xff] %vm1576, 0.0
          %1587 = vst.msk [vmem:[%s536 + $0xf0] sm:$0xff] %vm1576, 0.0
          %1588 = vst.msk [vmem:[%s536 + $0x108] sm:$0xff] %vm1576, 0.0
          %1589 = vst.msk [vmem:[%s536 + $0x120] sm:$0xff] %vm1576, 0.0
          %1590 = vst.msk [vmem:[%s536 + $0x138] sm:$0xff] %vm1576, 0.0
          %1591 = vst.msk [vmem:[%s536 + $0x150] sm:$0xff] %vm1576, 0.0
          %1592 = vst.msk [vmem:[%s536 + $0x168] sm:$0xff] %vm1576, 0.0
          %1593 = vst.msk [vmem:[%s536 + $0x8] sm:$0xff] %vm1077, %v1030
          %1594 = vst.msk [vmem:[%s536 + $0x20] sm:$0xff] %vm1077, %v1031
          %1595 = vst.msk [vmem:[%s536 + $0x38] sm:$0xff] %vm1077, %v1032
          %1596 = vst.msk [vmem:[%s536 + $0x50] sm:$0xff] %vm1077, %v1033
          %1597 = vst.msk [vmem:[%s536 + $0x68] sm:$0xff] %vm1077, %v1034
          %1598 = vst.msk [vmem:[%s536 + $0x80] sm:$0xff] %vm1077, %v1035
          %1599 = vst.msk [vmem:[%s536 + $0x98] sm:$0xff] %vm1077, %v1036
          %1600 = vst.msk [vmem:[%s536 + $0xb0] sm:$0xff] %vm1077, %v1037
          %1601 = vst.msk [vmem:[%s536 + $0xc8] sm:$0xff] %vm1077, %v1038
          %1602 = vst.msk [vmem:[%s536 + $0xe0] sm:$0xff] %vm1077, %v1039
          %1603 = vst.msk [vmem:[%s536 + $0xf8] sm:$0xff] %vm1077, %v1040
          %1604 = vst.msk [vmem:[%s536 + $0x110] sm:$0xff] %vm1077, %v1041
          %1605 = vst.msk [vmem:[%s536 + $0x128] sm:$0xff] %vm1077, %v1042
          %1606 = vst.msk [vmem:[%s536 + $0x140] sm:$0xff] %vm1077, %v1043
          %1607 = vst.msk [vmem:[%s536 + $0x158] sm:$0xff] %vm1077, %v1044
          %1608 = vst.msk [vmem:[%s536 + $0x170] sm:$0xff] %vm1077, %v1045
          %vm1609 = vcmask 1047808
          %1610 = vst.msk [vmem:[%s536 + $0x8] sm:$0xff] %vm1609, 0.0
          %1611 = vst.msk [vmem:[%s536 + $0x20] sm:$0xff] %vm1609, 0.0
          %1612 = vst.msk [vmem:[%s536 + $0x38] sm:$0xff] %vm1609, 0.0
          %1613 = vst.msk [vmem:[%s536 + $0x50] sm:$0xff] %vm1609, 0.0
          %1614 = vst.msk [vmem:[%s536 + $0x68] sm:$0xff] %vm1609, 0.0
          %1615 = vst.msk [vmem:[%s536 + $0x80] sm:$0xff] %vm1609, 0.0
          %1616 = vst.msk [vmem:[%s536 + $0x98] sm:$0xff] %vm1609, 0.0
          %1617 = vst.msk [vmem:[%s536 + $0xb0] sm:$0xff] %vm1609, 0.0
          %1618 = vst.msk [vmem:[%s536 + $0xc8] sm:$0xff] %vm1609, 0.0
          %1619 = vst.msk [vmem:[%s536 + $0xe0] sm:$0xff] %vm1609, 0.0
          %1620 = vst.msk [vmem:[%s536 + $0xf8] sm:$0xff] %vm1609, 0.0
          %1621 = vst.msk [vmem:[%s536 + $0x110] sm:$0xff] %vm1609, 0.0
          %1622 = vst.msk [vmem:[%s536 + $0x128] sm:$0xff] %vm1609, 0.0
          %1623 = vst.msk [vmem:[%s536 + $0x140] sm:$0xff] %vm1609, 0.0
          %1624 = vst.msk [vmem:[%s536 + $0x158] sm:$0xff] %vm1609, 0.0
          %1625 = vst.msk [vmem:[%s536 + $0x170] sm:$0xff] %vm1609, 0.0
          %1626 = vst.msk [vmem:[%s536 + $0x10] sm:$0xff] %vm1238, %v1199
          %1627 = vst.msk [vmem:[%s536 + $0x28] sm:$0xff] %vm1238, %v1200
          %1628 = vst.msk [vmem:[%s536 + $0x40] sm:$0xff] %vm1238, %v1201
          %1629 = vst.msk [vmem:[%s536 + $0x58] sm:$0xff] %vm1238, %v1202
          %1630 = vst.msk [vmem:[%s536 + $0x70] sm:$0xff] %vm1238, %v1203
          %1631 = vst.msk [vmem:[%s536 + $0x88] sm:$0xff] %vm1238, %v1204
          %1632 = vst.msk [vmem:[%s536 + $0xa0] sm:$0xff] %vm1238, %v1205
          %1633 = vst.msk [vmem:[%s536 + $0xb8] sm:$0xff] %vm1238, %v1206
          %1634 = vst.msk [vmem:[%s536 + $0xd0] sm:$0xff] %vm1238, %v1207
          %1635 = vst.msk [vmem:[%s536 + $0xe8] sm:$0xff] %vm1238, %v1208
          %1636 = vst.msk [vmem:[%s536 + $0x100] sm:$0xff] %vm1238, %v1209
          %1637 = vst.msk [vmem:[%s536 + $0x118] sm:$0xff] %vm1238, %v1210
          %1638 = vst.msk [vmem:[%s536 + $0x130] sm:$0xff] %vm1238, %v1211
          %1639 = vst.msk [vmem:[%s536 + $0x148] sm:$0xff] %vm1238, %v1212
          %1640 = vst.msk [vmem:[%s536 + $0x160] sm:$0xff] %vm1238, %v1213
          %1641 = vst.msk [vmem:[%s536 + $0x178] sm:$0xff] %vm1238, %v1214
          %vm1642 = vcmask 1047680
          %1643 = vst.msk [vmem:[%s536 + $0x10] sm:$0xff] %vm1642, 0.0
          %1644 = vst.msk [vmem:[%s536 + $0x28] sm:$0xff] %vm1642, 0.0
          %1645 = vst.msk [vmem:[%s536 + $0x40] sm:$0xff] %vm1642, 0.0
          %1646 = vst.msk [vmem:[%s536 + $0x58] sm:$0xff] %vm1642, 0.0
          %1647 = vst.msk [vmem:[%s536 + $0x70] sm:$0xff] %vm1642, 0.0
          %1648 = vst.msk [vmem:[%s536 + $0x88] sm:$0xff] %vm1642, 0.0
          %1649 = vst.msk [vmem:[%s536 + $0xa0] sm:$0xff] %vm1642, 0.0
          %1650 = vst.msk [vmem:[%s536 + $0xb8] sm:$0xff] %vm1642, 0.0
          %1651 = vst.msk [vmem:[%s536 + $0xd0] sm:$0xff] %vm1642, 0.0
          %1652 = vst.msk [vmem:[%s536 + $0xe8] sm:$0xff] %vm1642, 0.0
          %1653 = vst.msk [vmem:[%s536 + $0x100] sm:$0xff] %vm1642, 0.0
          %1654 = vst.msk [vmem:[%s536 + $0x118] sm:$0xff] %vm1642, 0.0
          %1655 = vst.msk [vmem:[%s536 + $0x130] sm:$0xff] %vm1642, 0.0
          %1656 = vst.msk [vmem:[%s536 + $0x148] sm:$0xff] %vm1642, 0.0
          %1657 = vst.msk [vmem:[%s536 + $0x160] sm:$0xff] %vm1642, 0.0
          %1658 = vst.msk [vmem:[%s536 + $0x178] sm:$0xff] %vm1642, 0.0
        $region80: #{tpu_custom_call.1} parent=71 // pred_fallthru
          _
        %v1659 = vld [vmem:[#allocation2] sm:$0xff]
        %v1660 = vld [vmem:[#allocation2 + $0x8] sm:$0xff]
        %v1661 = vld [vmem:[#allocation2 + $0x10] sm:$0xff]
        %v1662 = vld [vmem:[#allocation2 + $0x18] sm:$0xff]
        %v1663 = vld [vmem:[#allocation2 + $0x20] sm:$0xff]
        %v1664 = vld [vmem:[#allocation2 + $0x28] sm:$0xff]
        %v1665 = vld [vmem:[#allocation2 + $0x30] sm:$0xff]
        %v1666 = vld [vmem:[#allocation2 + $0x38] sm:$0xff]
        %v1667 = vld [vmem:[%s549] sm:$0xff]
        %v1668 = vld [vmem:[%s549 + $0x8] sm:$0xff]
        %v1669 = vld [vmem:[%s549 + $0x10] sm:$0xff]
        %v1670 = vld [vmem:[%s549 + $0x18] sm:$0xff]
        %v1671 = vld [vmem:[%s549 + $0x20] sm:$0xff]
        %v1672 = vld [vmem:[%s549 + $0x28] sm:$0xff]
        %v1673 = vld [vmem:[%s549 + $0x30] sm:$0xff]
        %v1674 = vld [vmem:[%s549 + $0x38] sm:$0xff]
        %v1675 = vld [vmem:[%s554] sm:$0x3]
        %v1677 = vlaneseq
        %v1678 = vshrl.u32 %v1677, 7
        %v1679 = vsub.s32 0, %v1678
        %v1680 = vrot.slane %v1675, %v1679
        %v1681 = vlaneseq
        %v1682 = vshrl.u32 %v1681, 7
        %v1683 = vsub.s32 1, %v1682
        %v1684 = vrot.slane %v1675, %v1683
        %v1695 = vunpack.c.l.b16 %v1667
        %v1696 = vunpack.c.h.b16 %v1667
        %v1697 = vunpack.c.l.b16 %v1668
        %v1698 = vunpack.c.h.b16 %v1668
        %v1699 = vunpack.c.l.b16 %v1669
        %v1700 = vunpack.c.h.b16 %v1669
        %v1701 = vunpack.c.l.b16 %v1670
        %v1702 = vunpack.c.h.b16 %v1670
        %v1703 = vunpack.c.l.b16 %v1671
        %v1704 = vunpack.c.h.b16 %v1671
        %v1705 = vunpack.c.l.b16 %v1672
        %v1706 = vunpack.c.h.b16 %v1672
        %v1707 = vunpack.c.l.b16 %v1673
        %v1708 = vunpack.c.h.b16 %v1673
        %v1709 = vunpack.c.l.b16 %v1674
        %v1710 = vunpack.c.h.b16 %v1674
        %v1711 = vpack.c.b16 %v1697, %v1695
        %v1712 = vpack.c.b16 %v1698, %v1696
        %v1713 = vpack.c.b16 %v1701, %v1699
        %v1714 = vpack.c.b16 %v1702, %v1700
        %v1715 = vpack.c.b16 %v1705, %v1703
        %v1716 = vpack.c.b16 %v1706, %v1704
        %v1717 = vpack.c.b16 %v1709, %v1707
        %v1718 = vpack.c.b16 %v1710, %v1708
        %vm1727 = vcmask 523264
        %v1729 = vsel %vm1727, %v1659, 0
        %v1732 = vsel %vm1727, %v1660, 0
        %v1735 = vsel %vm1727, %v1661, 0
        %v1738 = vsel %vm1727, %v1662, 0
        %v1741 = vsel %vm1727, %v1663, 0
        %v1744 = vsel %vm1727, %v1664, 0
        %v1747 = vsel %vm1727, %v1665, 0
        %v1750 = vsel %vm1727, %v1666, 0
        %1752 = vmatprep.subr.bf16.mxu0 %v1712
        %1753 = vmatpush1.bf16.msra.mxu0 %v1711
        %1754 = vmatprep.subr.bf16.mxu0 %v1714
        %1755 = vmatpush1.bf16.msra.mxu0 %v1713
        %1756 = vmatprep.subr.bf16.mxu0 %v1716
        %1757 = vmatpush1.bf16.msra.mxu0 %v1715
        %1758 = vmatprep.subr.bf16.mxu0 %v1718
        %1759 = vmatpush1.bf16.msra.mxu0 %v1717
        %1760 = vmatprep.subr.bf16.mxu0 0
        %1761 = vmatpush1.bf16.msra.mxu0 0
        %1762 = vmatprep.subr.bf16.mxu0 0
        %1763 = vmatpush1.bf16.msra.mxu0 0
        %1764 = vmatprep.subr.bf16.mxu0 0
        %1765 = vmatpush1.bf16.msra.mxu0 0
        %1766 = vmatprep.subr.bf16.mxu0 0
        %1767 = vmatpush1.bf16.msra.mxu0 0
        %1768 = vmatprep.subr.bf16.mxu0 0
        %1769 = vmatpush1.bf16.msra.mxu0 0
        %1770 = vmatprep.subr.bf16.mxu0 0
        %1771 = vmatpush1.bf16.msra.mxu0 0
        %1772 = vmatprep.subr.bf16.mxu0 0
        %1773 = vmatpush1.bf16.msra.mxu0 0
        %1774 = vmatprep.subr.bf16.mxu0 0
        %1775 = vmatpush1.bf16.msra.mxu0 0
        %1776 = vmatprep.subr.bf16.mxu0 0
        %1777 = vmatpush1.bf16.msra.mxu0 0
        %1778 = vmatprep.subr.bf16.mxu0 0
        %1779 = vmatpush1.bf16.msra.mxu0 0
        %1780 = vmatprep.subr.bf16.mxu0 0
        %1781 = vmatpush1.bf16.msra.mxu0 0
        %1782 = vmatprep.subr.bf16.mxu0 0
        %1783 = vmatpush1.bf16.msra.mxu0 0
        %1784 = vmatprep.mubr.bf16.mxu0 0
        %1785 = vmatmul.mubr.bf16.gmra.mrb[0].mxu0 %v1729
        %v1786 = vpop.f32.mrb[0].mxu0
        %v1787 = vadd.f32 %v1680, %v1786
        %v1788 = vpop.f32.mrb[0].mxu0
        %v1789 = vadd.f32 %v1684, %v1788
        %v1790 = vpop.f32.mrb[0].mxu0
        %v1791 = vadd.f32 %v1680, %v1790
        %v1792 = vpop.f32.mrb[0].mxu0
        %v1793 = vadd.f32 %v1684, %v1792
        %1794 = vmatprep.mubr.bf16.mxu0 0
        %1795 = vmatmul.mubr.bf16.gmra.mrb[0].mxu0 %v1732
        %v1796 = vpop.f32.mrb[0].mxu0
        %v1797 = vadd.f32 %v1680, %v1796
        %v1798 = vpop.f32.mrb[0].mxu0
        %v1799 = vadd.f32 %v1684, %v1798
        %v1800 = vpop.f32.mrb[0].mxu0
        %v1801 = vadd.f32 %v1680, %v1800
        %v1802 = vpop.f32.mrb[0].mxu0
        %v1803 = vadd.f32 %v1684, %v1802
        %1804 = vmatprep.mubr.bf16.mxu0 0
        %1805 = vmatmul.mubr.bf16.gmra.mrb[0].mxu0 %v1735
        %v1806 = vpop.f32.mrb[0].mxu0
        %v1807 = vadd.f32 %v1680, %v1806
        %v1808 = vpop.f32.mrb[0].mxu0
        %v1809 = vadd.f32 %v1684, %v1808
        %v1810 = vpop.f32.mrb[0].mxu0
        %v1811 = vadd.f32 %v1680, %v1810
        %v1812 = vpop.f32.mrb[0].mxu0
        %v1813 = vadd.f32 %v1684, %v1812
        %1814 = vmatprep.mubr.bf16.mxu0 0
        %1815 = vmatmul.mubr.bf16.gmra.mrb[0].mxu0 %v1738
        %v1816 = vpop.f32.mrb[0].mxu0
        %v1817 = vadd.f32 %v1680, %v1816
        %v1818 = vpop.f32.mrb[0].mxu0
        %v1819 = vadd.f32 %v1684, %v1818
        %v1820 = vpop.f32.mrb[0].mxu0
        %v1821 = vadd.f32 %v1680, %v1820
        %v1822 = vpop.f32.mrb[0].mxu0
        %v1823 = vadd.f32 %v1684, %v1822
        %1824 = vmatprep.mubr.bf16.mxu0 0
        %1825 = vmatmul.mubr.bf16.gmra.mrb[0].mxu0 %v1741
        %v1826 = vpop.f32.mrb[0].mxu0
        %v1827 = vadd.f32 %v1680, %v1826
        %v1828 = vpop.f32.mrb[0].mxu0
        %v1829 = vadd.f32 %v1684, %v1828
        %v1830 = vpop.f32.mrb[0].mxu0
        %v1831 = vadd.f32 %v1680, %v1830
        %v1832 = vpop.f32.mrb[0].mxu0
        %v1833 = vadd.f32 %v1684, %v1832
        %1834 = vmatprep.mubr.bf16.mxu0 0
        %1835 = vmatmul.mubr.bf16.gmra.mrb[0].mxu0 %v1744
        %v1836 = vpop.f32.mrb[0].mxu0
        %v1837 = vadd.f32 %v1680, %v1836
        %v1838 = vpop.f32.mrb[0].mxu0
        %v1839 = vadd.f32 %v1684, %v1838
        %v1840 = vpop.f32.mrb[0].mxu0
        %v1841 = vadd.f32 %v1680, %v1840
        %v1842 = vpop.f32.mrb[0].mxu0
        %v1843 = vadd.f32 %v1684, %v1842
        %1844 = vmatprep.mubr.bf16.mxu0 0
        %1845 = vmatmul.mubr.bf16.gmra.mrb[0].mxu0 %v1747
        %v1846 = vpop.f32.mrb[0].mxu0
        %v1847 = vadd.f32 %v1680, %v1846
        %v1848 = vpop.f32.mrb[0].mxu0
        %v1849 = vadd.f32 %v1684, %v1848
        %v1850 = vpop.f32.mrb[0].mxu0
        %v1851 = vadd.f32 %v1680, %v1850
        %v1852 = vpop.f32.mrb[0].mxu0
        %v1853 = vadd.f32 %v1684, %v1852
        %1854 = vmatprep.mubr.bf16.mxu0 0
        %1855 = vmatmul.mubr.bf16.gmra.mrb[0].mxu0 %v1750
        %v1856 = vpop.f32.mrb[0].mxu0
        %v1857 = vadd.f32 %v1680, %v1856
        %v1858 = vpop.f32.mrb[0].mxu0
        %v1859 = vadd.f32 %v1684, %v1858
        %v1860 = vpop.f32.mrb[0].mxu0
        %v1861 = vadd.f32 %v1680, %v1860
        %v1862 = vpop.f32.mrb[0].mxu0
        %v1863 = vadd.f32 %v1684, %v1862
        %1864 = vdwg.mxu0
        %v1865 = vpack.c.bf16 %v1791, %v1787
        %v1866 = vpack.c.bf16 %v1793, %v1789
        %v1867 = vpack.c.bf16 %v1801, %v1797
        %v1868 = vpack.c.bf16 %v1803, %v1799
        %v1869 = vpack.c.bf16 %v1811, %v1807
        %v1870 = vpack.c.bf16 %v1813, %v1809
        %v1871 = vpack.c.bf16 %v1821, %v1817
        %v1872 = vpack.c.bf16 %v1823, %v1819
        %v1873 = vpack.c.bf16 %v1831, %v1827
        %v1874 = vpack.c.bf16 %v1833, %v1829
        %v1875 = vpack.c.bf16 %v1841, %v1837
        %v1876 = vpack.c.bf16 %v1843, %v1839
        %v1877 = vpack.c.bf16 %v1851, %v1847
        %v1878 = vpack.c.bf16 %v1853, %v1849
        %v1879 = vpack.c.bf16 %v1861, %v1857
        %v1880 = vpack.c.bf16 %v1863, %v1859
        %v1881 = vxor.u32 %v1865, 2147516416
        %v1882 = vxor.u32 %v1866, 2147516416
        %v1883 = vxor.u32 %v1867, 2147516416
        %v1884 = vxor.u32 %v1868, 2147516416
        %v1885 = vxor.u32 %v1869, 2147516416
        %v1886 = vxor.u32 %v1870, 2147516416
        %v1887 = vxor.u32 %v1871, 2147516416
        %v1888 = vxor.u32 %v1872, 2147516416
        %v1889 = vxor.u32 %v1873, 2147516416
        %v1890 = vxor.u32 %v1874, 2147516416
        %v1891 = vxor.u32 %v1875, 2147516416
        %v1892 = vxor.u32 %v1876, 2147516416
        %v1893 = vxor.u32 %v1877, 2147516416
        %v1894 = vxor.u32 %v1878, 2147516416
        %v1895 = vxor.u32 %v1879, 2147516416
        %v1896 = vxor.u32 %v1880, 2147516416
        %v1898 = vmul.bf16 %v1881, 1069105081
        %v1899 = vpow.bf16.pop %v1898
        %v1901 = vmul.bf16 %v1882, 1069105081
        %v1902 = vpow.bf16.pop %v1901
        %v1904 = vmul.bf16 %v1883, 1069105081
        %v1905 = vpow.bf16.pop %v1904
        %v1907 = vmul.bf16 %v1884, 1069105081
        %v1908 = vpow.bf16.pop %v1907
        %v1910 = vmul.bf16 %v1885, 1069105081
        %v1911 = vpow.bf16.pop %v1910
        %v1913 = vmul.bf16 %v1886, 1069105081
        %v1914 = vpow.bf16.pop %v1913
        %v1916 = vmul.bf16 %v1887, 1069105081
        %v1917 = vpow.bf16.pop %v1916
        %v1919 = vmul.bf16 %v1888, 1069105081
        %v1920 = vpow.bf16.pop %v1919
        %v1922 = vmul.bf16 %v1889, 1069105081
        %v1923 = vpow.bf16.pop %v1922
        %v1925 = vmul.bf16 %v1890, 1069105081
        %v1926 = vpow.bf16.pop %v1925
        %v1928 = vmul.bf16 %v1891, 1069105081
        %v1929 = vpow.bf16.pop %v1928
        %v1931 = vmul.bf16 %v1892, 1069105081
        %v1932 = vpow.bf16.pop %v1931
        %v1934 = vmul.bf16 %v1893, 1069105081
        %v1935 = vpow.bf16.pop %v1934
        %v1937 = vmul.bf16 %v1894, 1069105081
        %v1938 = vpow.bf16.pop %v1937
        %v1940 = vmul.bf16 %v1895, 1069105081
        %v1941 = vpow.bf16.pop %v1940
        %v1943 = vmul.bf16 %v1896, 1069105081
        %v1944 = vpow.bf16.pop %v1943
        %v1945 = vadd.bf16 %v1899, 1065369472
        %v1946 = vadd.bf16 %v1902, 1065369472
        %v1947 = vadd.bf16 %v1905, 1065369472
        %v1948 = vadd.bf16 %v1908, 1065369472
        %v1949 = vadd.bf16 %v1911, 1065369472
        %v1950 = vadd.bf16 %v1914, 1065369472
        %v1951 = vadd.bf16 %v1917, 1065369472
        %v1952 = vadd.bf16 %v1920, 1065369472
        %v1953 = vadd.bf16 %v1923, 1065369472
        %v1954 = vadd.bf16 %v1926, 1065369472
        %v1955 = vadd.bf16 %v1929, 1065369472
        %v1956 = vadd.bf16 %v1932, 1065369472
        %v1957 = vadd.bf16 %v1935, 1065369472
        %v1958 = vadd.bf16 %v1938, 1065369472
        %v1959 = vadd.bf16 %v1941, 1065369472
        %v1960 = vadd.bf16 %v1944, 1065369472
        %v1961 = vrcp.bf16.pop %v1945
        %v1962 = vmul.bf16 1065369472, %v1961
        %v1963 = vrcp.bf16.pop %v1946
        %v1964 = vmul.bf16 1065369472, %v1963
        %v1965 = vrcp.bf16.pop %v1947
        %v1966 = vmul.bf16 1065369472, %v1965
        %v1967 = vrcp.bf16.pop %v1948
        %v1968 = vmul.bf16 1065369472, %v1967
        %v1969 = vrcp.bf16.pop %v1949
        %v1970 = vmul.bf16 1065369472, %v1969
        %v1971 = vrcp.bf16.pop %v1950
        %v1972 = vmul.bf16 1065369472, %v1971
        %v1973 = vrcp.bf16.pop %v1951
        %v1974 = vmul.bf16 1065369472, %v1973
        %v1975 = vrcp.bf16.pop %v1952
        %v1976 = vmul.bf16 1065369472, %v1975
        %v1977 = vrcp.bf16.pop %v1953
        %v1978 = vmul.bf16 1065369472, %v1977
        %v1979 = vrcp.bf16.pop %v1954
        %v1980 = vmul.bf16 1065369472, %v1979
        %v1981 = vrcp.bf16.pop %v1955
        %v1982 = vmul.bf16 1065369472, %v1981
        %v1983 = vrcp.bf16.pop %v1956
        %v1984 = vmul.bf16 1065369472, %v1983
        %v1985 = vrcp.bf16.pop %v1957
        %v1986 = vmul.bf16 1065369472, %v1985
        %v1987 = vrcp.bf16.pop %v1958
        %v1988 = vmul.bf16 1065369472, %v1987
        %v1989 = vrcp.bf16.pop %v1959
        %v1990 = vmul.bf16 1065369472, %v1989
        %v1991 = vrcp.bf16.pop %v1960
        %v1992 = vmul.bf16 1065369472, %v1991
        %v2009 = vunpack.c.l.b16 %v1962
        %v2010 = vunpack.c.l.b16 %v1964
        %v2011 = vunpack.c.h.b16 %v1962
        %v2012 = vunpack.c.h.b16 %v1964
        %v2013 = vunpack.c.l.b16 %v1966
        %v2014 = vunpack.c.l.b16 %v1968
        %v2015 = vunpack.c.h.b16 %v1966
        %v2016 = vunpack.c.h.b16 %v1968
        %v2017 = vunpack.c.l.b16 %v1970
        %v2018 = vunpack.c.l.b16 %v1972
        %v2019 = vunpack.c.h.b16 %v1970
        %v2020 = vunpack.c.h.b16 %v1972
        %v2021 = vunpack.c.l.b16 %v1974
        %v2022 = vunpack.c.l.b16 %v1976
        %v2023 = vunpack.c.h.b16 %v1974
        %v2024 = vunpack.c.h.b16 %v1976
        %v2025 = vunpack.c.l.b16 %v1978
        %v2026 = vunpack.c.l.b16 %v1980
        %v2027 = vunpack.c.h.b16 %v1978
        %v2028 = vunpack.c.h.b16 %v1980
        %v2029 = vunpack.c.l.b16 %v1982
        %v2030 = vunpack.c.l.b16 %v1984
        %v2031 = vunpack.c.h.b16 %v1982
        %v2032 = vunpack.c.h.b16 %v1984
        %v2033 = vunpack.c.l.b16 %v1986
        %v2034 = vunpack.c.l.b16 %v1988
        %v2035 = vunpack.c.h.b16 %v1986
        %v2036 = vunpack.c.h.b16 %v1988
        %v2037 = vunpack.c.l.b16 %v1990
        %v2038 = vunpack.c.l.b16 %v1992
        %v2039 = vunpack.c.h.b16 %v1990
        %v2040 = vunpack.c.h.b16 %v1992
        %v2041 = vpack.c.b16 %v2010, %v2009
        %v2042 = vpack.c.b16 %v2012, %v2011
        %v2043 = vpack.c.b16 %v2014, %v2013
        %v2044 = vpack.c.b16 %v2016, %v2015
        %v2045 = vpack.c.b16 %v2018, %v2017
        %v2046 = vpack.c.b16 %v2020, %v2019
        %v2047 = vpack.c.b16 %v2022, %v2021
        %v2048 = vpack.c.b16 %v2024, %v2023
        %v2049 = vpack.c.b16 %v2026, %v2025
        %v2050 = vpack.c.b16 %v2028, %v2027
        %v2051 = vpack.c.b16 %v2030, %v2029
        %v2052 = vpack.c.b16 %v2032, %v2031
        %v2053 = vpack.c.b16 %v2034, %v2033
        %v2054 = vpack.c.b16 %v2036, %v2035
        %v2055 = vpack.c.b16 %v2038, %v2037
        %v2056 = vpack.c.b16 %v2040, %v2039
        %2073 = vst [vmem:[%s543] sm:$0xff] %v2041
        %2074 = vst [vmem:[%s543 + $0x8] sm:$0xff] %v2042
        %2075 = vst [vmem:[%s543 + $0x10] sm:$0xff] %v2043
        %2076 = vst [vmem:[%s543 + $0x18] sm:$0xff] %v2044
        %2077 = vst [vmem:[%s543 + $0x20] sm:$0xff] %v2045
        %2078 = vst [vmem:[%s543 + $0x28] sm:$0xff] %v2046
        %2079 = vst [vmem:[%s543 + $0x30] sm:$0xff] %v2047
        %2080 = vst [vmem:[%s543 + $0x38] sm:$0xff] %v2048
        %2081 = vst [vmem:[%s543 + $0x40] sm:$0xff] %v2049
        %2082 = vst [vmem:[%s543 + $0x48] sm:$0xff] %v2050
        %2083 = vst [vmem:[%s543 + $0x50] sm:$0xff] %v2051
        %2084 = vst [vmem:[%s543 + $0x58] sm:$0xff] %v2052
        %2085 = vst [vmem:[%s543 + $0x60] sm:$0xff] %v2053
        %2086 = vst [vmem:[%s543 + $0x68] sm:$0xff] %v2054
        %2087 = vst [vmem:[%s543 + $0x70] sm:$0xff] %v2055
        %2088 = vst [vmem:[%s543 + $0x78] sm:$0xff] %v2056
        %s2089 = sand.u32 %s345, 1
        %s2090 = scalar_lea.sflag [#allocation7], %s2089
        %s2091 = sand.u32 %s345, 1
        %s2092 = smul.addr %s2091, 384
        %s2093 = scalar_lea.vmem [#allocation8], %s2092
        %s2094 = sand.u32 %s373, 1
        %s2095 = scalar_lea.sflag [#allocation10], %s2094
        %s2096 = sand.u32 %s373, 1
        %s2097 = smul.addr %s2096, 128
        %s2098 = scalar_lea.vmem [#allocation9], %s2097
        // Predicated region
        $region81: #{tpu_custom_call.1} parent=71 // pred_check
          %p2099 = pneg %p355
        $region82: #{tpu_custom_call.1} parent=71 // pred_check_branch
          %2101 = sbr.rel (%p2099) target = $region84
        $region83: #{tpu_custom_call.1} parent=71 // pred_region
          %s2102 = smul.u32 16, %s41
          %s2104 = ssub.s32 6144, 6144
          %2105 = vsyncadd %s2090, %s2104
          %s2106 = smul.addr %s2102, 3
          %s2107 = smul.addr %s2106, 128
          %s2108 = scalar_lea.hbm %s14, %s2107
          %s2109 = sshll.u32 %s2093, 4
          %s2110 = int_to_ptr.vmem [resolvable:$true] %s2109
          %2115 = dma.vmem_to_hbm [thread:$0]  %s2110, 6144, %s2108, %s2090, 384, 384, 24
        $region84: #{tpu_custom_call.1} parent=71 // pred_fallthru
          _
        // Predicated region
        $region85: #{tpu_custom_call.1} parent=71 // pred_check
          %p2116 = pneg %p383
        $region86: #{tpu_custom_call.1} parent=71 // pred_check_branch
          %2118 = sbr.rel (%p2116) target = $region88
        $region87: #{tpu_custom_call.1} parent=71 // pred_region
          %s2119 = smul.u32 16, %s41
          %s2120 = smul.u32 2, %s42
          %s2122 = ssub.s32 2048, 2048
          %2123 = vsyncadd %s2095, %s2122
          %s2124 = smul.addr %s2119, 2
          %s2125 = sadd.s32 %s2120, %s2124
          %s2126 = smul.addr %s2125, 64
          %s2127 = scalar_lea.hbm %s15, %s2126
          %s2128 = sshll.u32 %s2098, 4
          %s2129 = int_to_ptr.vmem [resolvable:$true] %s2128
          %2134 = dma.vmem_to_hbm [thread:$0]  %s2129, 2048, %s2127, %s2095, 128, 128, 8
        $region88: #{tpu_custom_call.1} parent=71 // pred_fallthru
          _
      $region72: #{tpu_custom_call.1} parent=5 // pred_fallthru
        _
      %p2135 = scmp.le.s32.totalorder 2, %s32
      // Predicated region
      $region89: #{tpu_custom_call.1} parent=5 // pred_check
        %p2136 = pneg %p2135
      $region90: #{tpu_custom_call.1} parent=5 // pred_check_branch
        %2138 = sbr.rel (%p2136) target = $region92
      $region91: #{tpu_custom_call.1} parent=5 // pred_region
        %s2139 = ssub.s32 %s32, 2
        // Predicated region
        $region93: #{tpu_custom_call.1} parent=91 // pred_check
          %p2140 = pneg %p361
        $region94: #{tpu_custom_call.1} parent=91 // pred_check_branch
          %2142 = sbr.rel (%p2140) target = $region96
        $region95: #{tpu_custom_call.1} parent=91 // pred_region
          %s2143 = sand.u32 %s346, 1
          %s2144 = scalar_lea.sflag [#allocation7], %s2143
          %s2145 = sand.u32 %s346, 1
          %s2146 = smul.addr %s2145, 384
          %s2147 = scalar_lea.vmem [#allocation8], %s2146
          %2148 = dma.done %s2144, 6144
        $region96: #{tpu_custom_call.1} parent=91 // pred_fallthru
          _
        // Predicated region
        $region97: #{tpu_custom_call.1} parent=91 // pred_check
          %p2149 = pneg %p389
        $region98: #{tpu_custom_call.1} parent=91 // pred_check_branch
          %2151 = sbr.rel (%p2149) target = $region100
        $region99: #{tpu_custom_call.1} parent=91 // pred_region
          %s2152 = sand.u32 %s374, 1
          %s2153 = scalar_lea.sflag [#allocation10], %s2152
          %s2154 = sand.u32 %s374, 1
          %s2155 = smul.addr %s2154, 128
          %s2156 = scalar_lea.vmem [#allocation9], %s2155
          %2157 = dma.done %s2153, 2048
        $region100: #{tpu_custom_call.1} parent=91 // pred_fallthru
          _
      $region92: #{tpu_custom_call.1} parent=5 // pred_fallthru
        _
    $region6: #{tpu_custom_call.1} parent=1 // loop_footer
      %s36 = sadd.s32 1, %s32
    $region7: #{tpu_custom_call.1} parent=1 // loop_footer_branch
      %31 = sbr.rel target = $region3
    $region8: #{tpu_custom_call.1} parent=1 // loop_exit
      _
    %2158 = vsyncpa [#allocation6], 1
    %s2159 = scalar_lea.sflag [#allocation6], 1
    %2160 = vsyncpa %s2159, 1
    %2161 = vsyncpa [#allocation7], 1
    %s2162 = scalar_lea.sflag [#allocation7], 1
    %2163 = vsyncpa %s2162, 1
    %2164 = vsyncpa [#allocation10], 1
    %s2165 = scalar_lea.sflag [#allocation10], 1
    %2166 = vsyncpa %s2165, 1

</llo_original>
